<compile_context>
chip_gen: v5e
topology: v5e:2x2
jax: 0.10.0
libtpu: 0.0.40
codegen_flags: <defaults>
</compile_context>

<pallas_src>
import functools

import jax
import jax.numpy as jnp
from jax import lax
from jax.experimental import pallas as pl
from jax.experimental.pallas import tpu as pltpu


def _cross_attention_kernel(x_ref, y_ref, wq_ref, bq_ref, wkv_ref, bkv_ref,
                            wot_ref, o_ref, *, heads, eps):
    # Per grid step (one batch element):
    #   x_ref  : (1, C, N)  channels-major image tokens (NCHW, H*W flattened)
    #   y_ref  : (1, M, C)  context tokens
    #   wq_ref : (C, I)     gamma- and scale-folded Q weight, I = heads*dim_head
    #   bq_ref : (1, I)     beta-folded (and scaled) Q bias
    #   wkv_ref: (C, 2I)    gamma-folded KV weight
    #   bkv_ref: (1, 2I)    beta-folded KV bias
    #   wot_ref: (C, I)     output projection, pre-transposed (Wout^T)
    #   o_ref  : (1, C, N)  lane-dense output block (N on the lane axis)
    x = x_ref[0].astype(jnp.float32)               # (C, N)  -- no transpose
    y = y_ref[0].astype(jnp.float32)               # (M, C)

    # LayerNorm statistics only; the affine (gamma/beta) is folded into the
    # projection weights/biases wrapper-side.
    mu_x = jnp.mean(x, axis=0, keepdims=True)                        # (1, N)
    var_x = jnp.mean(jnp.square(x - mu_x), axis=0, keepdims=True)    # (1, N)
    xn = (x - mu_x) * lax.rsqrt(var_x + eps)                         # (C, N)

    mu_y = jnp.mean(y, axis=-1, keepdims=True)                       # (M, 1)
    var_y = jnp.mean(jnp.square(y - mu_y), axis=-1, keepdims=True)   # (M, 1)
    yn = (y - mu_y) * lax.rsqrt(var_y + eps)                         # (M, C)

    # Q projection contracts the LHS leading (channel) axis so x never needs an
    # in-kernel transpose (MXU handles the transposed LHS natively).
    q = lax.dot_general(xn, wq_ref[...], (((0,), (0,)), ((), ())),
                        preferred_element_type=jnp.float32)          # (N, I)
    q = q + bq_ref[...]
    kv = jnp.dot(yn, wkv_ref[...],
                 preferred_element_type=jnp.float32) + bkv_ref[...]  # (M, 2I)

    inner = q.shape[-1]
    d = inner // heads

    out_cn = None                                   # (C, N) accumulator
    for h in range(heads):                          # static unroll over heads
        sl = slice(h * d, (h + 1) * d)              # 128-aligned lane slice
        qh = q[:, sl]                               # (N, d)
        kh = kv[:, sl]                              # (M, d)
        vh = kv[:, inner + h * d:inner + (h + 1) * d]                # (M, d)

        # scale (dim_head^-0.5) already folded into wq/bq
        dots = lax.dot_general(qh, kh, (((1,), (1,)), ((), ())),
                               preferred_element_type=jnp.float32)   # (N, M)
        m = jnp.max(dots, axis=-1, keepdims=True)
        p = jnp.exp(dots - m)                                        # (N, M)
        l = jnp.sum(p, axis=-1, keepdims=True)                       # (N, 1)
        pv = jnp.dot(p, vh, preferred_element_type=jnp.float32)      # (N, d)
        # Normalize the (N, d) PV result (not the (N, M) scores); reciprocal on
        # the EUP slot, multiply instead of divide.
        pv = pv * pl.reciprocal(l, approx=True)

        # Per-head slice of the pre-transposed output projection, accumulated
        # directly in the lane-dense (C, N) layout (trans_b matmul). No concat,
        # head_out dies immediately.
        contrib = lax.dot_general(wot_ref[:, sl], pv,
                                  (((1,), (1,)), ((), ())),
                                  preferred_element_type=jnp.float32)  # (C, N)
        out_cn = contrib if out_cn is None else out_cn + contrib

    o_ref[0] = out_cn.astype(o_ref.dtype)           # store lane-dense, no .T


def cross_attention_pallas(x_nchw, y, params, *, heads, dim_head):
    """x_nchw: (B, dim, H, W); y: (B, M, dim). Returns (B, dim, H, W)."""
    B, C, H, W = x_nchw.shape
    N = H * W
    M = y.shape[1]
    inner = heads * dim_head
    scale = float(dim_head) ** -0.5

    x_cn = x_nchw.reshape(B, C, N)                 # free reshape, no HBM transpose

    gamma = params["gamma"].astype(jnp.float32)    # (C,)
    beta = params["beta"].astype(jnp.float32)      # (C,)
    # Fold LayerNorm affine (and the Q attention scale) into the projection
    # weights/biases: pure wrapper-side prep, zero in-kernel cost.
    wq = (gamma[:, None] * params["wq"]) * scale            # (C, I)
    bq = (beta @ params["wq"])[None, :] * scale             # (1, I)
    wkv = gamma[:, None] * params["wkv"]                    # (C, 2I)
    bkv = (beta @ params["wkv"])[None, :]                   # (1, 2I)
    wot = params["wo"].T                                    # (C, I)  pre-transposed

    kernel = functools.partial(_cross_attention_kernel, heads=heads, eps=1e-5)

    # NOTE(production scale): on v7x (64 MiB VMEM) additionally single-buffer
    # the constant weight inputs (pipeline_mode=pl.Buffered(1)) and raise
    # vmem_limit_bytes; unnecessary at this demo size.
    out_cn = pl.pallas_call(
        kernel,
        out_shape=jax.ShapeDtypeStruct((B, C, N), x_nchw.dtype),
        grid_spec=pltpu.PrefetchScalarGridSpec(
            num_scalar_prefetch=0,
            grid=(B,),
            in_specs=[
                pl.BlockSpec((1, C, N), lambda b: (b, 0, 0)),
                pl.BlockSpec((1, M, C), lambda b: (b, 0, 0)),
                pl.BlockSpec((C, inner), lambda b: (0, 0)),
                pl.BlockSpec((1, inner), lambda b: (0, 0)),
                pl.BlockSpec((C, 2 * inner), lambda b: (0, 0)),
                pl.BlockSpec((1, 2 * inner), lambda b: (0, 0)),
                pl.BlockSpec((C, inner), lambda b: (0, 0)),
            ],
            out_specs=pl.BlockSpec((1, C, N), lambda b: (b, 0, 0)),
        ),
        compiler_params=pltpu.CompilerParams(
            dimension_semantics=("parallel",),
            vmem_limit_bytes=32 * 1024 * 1024),
    )(x_cn, y, wq, bq, wkv, bkv, wot)

    return out_cn.reshape(B, C, H, W)


def make_params(key, dim, heads, dim_head):
    """Synthetic weights already packed in (in, out) layout for the kernel."""
    inner = heads * dim_head
    ks = jax.random.split(key, 5)
    return {
        "gamma": 1.0 + 0.1 * jax.random.normal(ks[0], (dim,), jnp.float32),
        "beta": 0.1 * jax.random.normal(ks[1], (dim,), jnp.float32),
        "wq": 0.1 * jax.random.normal(ks[2], (dim, inner), jnp.float32),
        "wkv": 0.1 * jax.random.normal(ks[3], (dim, 2 * inner), jnp.float32),
        "wo": 0.1 * jax.random.normal(ks[4], (inner, dim), jnp.float32),
    }


def cross_attention_reference(x, y, params, *, heads, dim_head):
    """Pure-JAX reference mirroring the PyTorch module exactly."""
    B, C, H, W = x.shape
    N = H * W
    eps = 1e-5
    hp = lax.Precision.HIGHEST

    xs = jnp.transpose(x.reshape(B, C, N), (0, 2, 1))      # (B, N, C)

    def ln(t):
        mu = jnp.mean(t, axis=-1, keepdims=True)
        var = jnp.mean((t - mu) ** 2, axis=-1, keepdims=True)
        return (t - mu) / jnp.sqrt(var + eps) * params["gamma"] + params["beta"]

    xn = ln(xs)
    yn = ln(y)
    q = jnp.einsum('bnc,ci->bni', xn, params["wq"], precision=hp)
    kv = jnp.einsum('bmc,ci->bmi', yn, params["wkv"], precision=hp)
    inner = heads * dim_head
    k, v = kv[..., :inner], kv[..., inner:]

    def split_heads(t):
        b, n, _ = t.shape
        return t.reshape(b, n, heads, dim_head).transpose(0, 2, 1, 3)

    qh, kh, vh = split_heads(q), split_heads(k), split_heads(v)
    dots = jnp.einsum('bhnd,bhmd->bhnm', qh, kh, precision=hp) * (dim_head ** -0.5)
    attn = jax.nn.softmax(dots, axis=-1)
    o = jnp.einsum('bhnm,bhmd->bhnd', attn, vh, precision=hp)
    o = o.transpose(0, 2, 1, 3).reshape(B, N, inner)
    o = jnp.einsum('bni,ic->bnc', o, params["wo"], precision=hp)
    return jnp.transpose(o, (0, 2, 1)).reshape(B, C, H, W)


if __name__ == "__main__":
    # Small but lane-friendly config: inner_dim = 256 (per-head slices are
    # 128-aligned), N = 256 lanes for the stored (C, N) output blocks.
    B, dim, H, W = 2, 64, 16, 16
    heads, dim_head = 2, 128
    M = 128                                       # context sequence length of y

    key = jax.random.PRNGKey(0)
    kx, ky, kp = jax.random.split(key, 3)
    x = jax.random.normal(kx, (B, dim, H, W), jnp.float32)
    y = jax.random.normal(ky, (B, M, dim), jnp.float32)
    params = make_params(kp, dim, heads, dim_head)

    out = cross_attention_pallas(x, y, params, heads=heads, dim_head=dim_head)
    out = jax.block_until_ready(out)

    ref = jax.block_until_ready(
        cross_attention_reference(x, y, params, heads=heads, dim_head=dim_head))
    assert out.shape == (B, dim, H, W)
    max_err = float(jnp.max(jnp.abs(out - ref)))
    # Tolerance slightly relaxed vs. the exact-divide version: approximate EUP
    # reciprocal + folded-affine rounding order.
    assert jnp.allclose(out, ref, atol=5e-3, rtol=5e-3), max_err

    print("KERNEL_OK")
</pallas_src>

<mosaic_0001>
module attributes {stable_mosaic.version = 11 : i64} {
  func.func @_cross_attention_kernel(%arg0: i32, %arg1: memref<1x64x256xf32, #tpu.memory_space<vmem>>, %arg2: memref<1x128x64xf32, #tpu.memory_space<vmem>>, %arg3: memref<64x256xf32, #tpu.memory_space<vmem>>, %arg4: memref<1x256xf32, #tpu.memory_space<vmem>>, %arg5: memref<64x512xf32, #tpu.memory_space<vmem>>, %arg6: memref<1x512xf32, #tpu.memory_space<vmem>>, %arg7: memref<64x256xf32, #tpu.memory_space<vmem>>, %arg8: memref<1x64x256xf32, #tpu.memory_space<vmem>>) attributes {dimension_semantics = [#tpu.dimension_semantics<parallel>], iteration_bounds = array<i64: 2>, scalar_prefetch = 0 : i64, scratch_operands = 0 : i64, tpu.core_type = #tpu.core_type<tc>, window_params = [{transform_indices = @transform_0, window_bounds = array<i64: 1, 64, 256>}, {transform_indices = @transform_1, window_bounds = array<i64: 1, 128, 64>}, {pipeline_mode = #tpu.pipeline_mode<synchronous>, transform_indices = @transform_2, window_bounds = array<i64: 64, 256>}, {pipeline_mode = #tpu.pipeline_mode<synchronous>, transform_indices = @transform_3, window_bounds = array<i64: 1, 256>}, {pipeline_mode = #tpu.pipeline_mode<synchronous>, transform_indices = @transform_4, window_bounds = array<i64: 64, 512>}, {pipeline_mode = #tpu.pipeline_mode<synchronous>, transform_indices = @transform_5, window_bounds = array<i64: 1, 512>}, {pipeline_mode = #tpu.pipeline_mode<synchronous>, transform_indices = @transform_6, window_bounds = array<i64: 64, 256>}, {transform_indices = @transform_7, window_bounds = array<i64: 1, 64, 256>}]} {
    %c0 = arith.constant 0 : index
    %c0_0 = arith.constant 0 : index
    %c0_1 = arith.constant 0 : index
    %0 = vector.load %arg1[%c0, %c0_0, %c0_1] : memref<1x64x256xf32, #tpu.memory_space<vmem>>, vector<1x64x256xf32>
    %1 = vector.shape_cast %0 : vector<1x64x256xf32> to vector<64x256xf32>
    %c0_2 = arith.constant 0 : index
    %c0_3 = arith.constant 0 : index
    %c0_4 = arith.constant 0 : index
    %2 = vector.load %arg2[%c0_2, %c0_3, %c0_4] : memref<1x128x64xf32, #tpu.memory_space<vmem>>, vector<1x128x64xf32>
    %3 = vector.shape_cast %2 : vector<1x128x64xf32> to vector<128x64xf32>
    %cst = arith.constant dense<0.000000e+00> : vector<256xf32>
    %4 = vector.multi_reduction <add>, %1, %cst [0] : vector<64x256xf32> to vector<256xf32>
    %5 = vector.shape_cast %4 : vector<256xf32> to vector<1x256xf32>
    %cst_5 = arith.constant 6.400000e+01 : f32
    %6 = vector.broadcast %cst_5 : f32 to vector<1x256xf32>
    %7 = arith.divf %5, %6 : vector<1x256xf32>
    %8 = vector.broadcast %7 : vector<1x256xf32> to vector<64x256xf32>
    %9 = arith.subf %1, %8 : vector<64x256xf32>
    %10 = arith.mulf %9, %9 : vector<64x256xf32>
    %cst_6 = arith.constant dense<0.000000e+00> : vector<256xf32>
    %11 = vector.multi_reduction <add>, %10, %cst_6 [0] : vector<64x256xf32> to vector<256xf32>
    %12 = vector.shape_cast %11 : vector<256xf32> to vector<1x256xf32>
    %cst_7 = arith.constant 6.400000e+01 : f32
    %13 = vector.broadcast %cst_7 : f32 to vector<1x256xf32>
    %14 = arith.divf %12, %13 : vector<1x256xf32>
    %15 = vector.broadcast %7 : vector<1x256xf32> to vector<64x256xf32>
    %16 = arith.subf %1, %15 : vector<64x256xf32>
    %cst_8 = arith.constant 9.99999974E-6 : f32
    %17 = vector.broadcast %cst_8 : f32 to vector<1x256xf32>
    %18 = arith.addf %14, %17 : vector<1x256xf32>
    %19 = math.rsqrt %18 : vector<1x256xf32>
    %20 = vector.broadcast %19 : vector<1x256xf32> to vector<64x256xf32>
    %21 = arith.mulf %16, %20 : vector<64x256xf32>
    %cst_9 = arith.constant dense<0.000000e+00> : vector<128xf32>
    %22 = vector.multi_reduction <add>, %3, %cst_9 [1] : vector<128x64xf32> to vector<128xf32>
    %23 = vector.shape_cast %22 : vector<128xf32> to vector<128x1xf32>
    %cst_10 = arith.constant 6.400000e+01 : f32
    %24 = vector.broadcast %cst_10 : f32 to vector<128x1xf32>
    %25 = arith.divf %23, %24 : vector<128x1xf32>
    %26 = vector.broadcast %25 : vector<128x1xf32> to vector<128x64xf32>
    %27 = arith.subf %3, %26 : vector<128x64xf32>
    %28 = arith.mulf %27, %27 : vector<128x64xf32>
    %cst_11 = arith.constant dense<0.000000e+00> : vector<128xf32>
    %29 = vector.multi_reduction <add>, %28, %cst_11 [1] : vector<128x64xf32> to vector<128xf32>
    %30 = vector.shape_cast %29 : vector<128xf32> to vector<128x1xf32>
    %cst_12 = arith.constant 6.400000e+01 : f32
    %31 = vector.broadcast %cst_12 : f32 to vector<128x1xf32>
    %32 = arith.divf %30, %31 : vector<128x1xf32>
    %33 = vector.broadcast %25 : vector<128x1xf32> to vector<128x64xf32>
    %34 = arith.subf %3, %33 : vector<128x64xf32>
    %cst_13 = arith.constant 9.99999974E-6 : f32
    %35 = vector.broadcast %cst_13 : f32 to vector<128x1xf32>
    %36 = arith.addf %32, %35 : vector<128x1xf32>
    %37 = math.rsqrt %36 : vector<128x1xf32>
    %38 = vector.broadcast %37 : vector<128x1xf32> to vector<128x64xf32>
    %39 = arith.mulf %34, %38 : vector<128x64xf32>
    %c0_14 = arith.constant 0 : index
    %c0_15 = arith.constant 0 : index
    %40 = vector.load %arg3[%c0_14, %c0_15] : memref<64x256xf32, #tpu.memory_space<vmem>>, vector<64x256xf32>
    %cst_16 = arith.constant dense<0.000000e+00> : vector<256x256xf32>
    %41 = tpu.matmul %21, %40, %cst_16 {dimension_numbers = #tpu.dot_dimension_numbers<[0], [0], [1], [1], [0, 1, 1, 1], [], []>} : vector<64x256xf32>, vector<64x256xf32>, vector<256x256xf32> -> vector<256x256xf32>
    %c0_17 = arith.constant 0 : index
    %c0_18 = arith.constant 0 : index
    %42 = vector.load %arg4[%c0_17, %c0_18] : memref<1x256xf32, #tpu.memory_space<vmem>>, vector<1x256xf32>
    %43 = vector.broadcast %42 : vector<1x256xf32> to vector<256x256xf32>
    %44 = arith.addf %41, %43 : vector<256x256xf32>
    %c0_19 = arith.constant 0 : index
    %c0_20 = arith.constant 0 : index
    %45 = vector.load %arg5[%c0_19, %c0_20] : memref<64x512xf32, #tpu.memory_space<vmem>>, vector<64x512xf32>
    %cst_21 = arith.constant dense<0.000000e+00> : vector<128x512xf32>
    %46 = tpu.matmul %39, %45, %cst_21 {dimension_numbers = #tpu.dot_dimension_numbers<[1], [0], [0], [1], [0, 0, 1, 1], [], []>} : vector<128x64xf32>, vector<64x512xf32>, vector<128x512xf32> -> vector<128x512xf32>
    %c0_22 = arith.constant 0 : index
    %c0_23 = arith.constant 0 : index
    %47 = vector.load %arg6[%c0_22, %c0_23] : memref<1x512xf32, #tpu.memory_space<vmem>>, vector<1x512xf32>
    %48 = vector.broadcast %47 : vector<1x512xf32> to vector<128x512xf32>
    %49 = arith.addf %46, %48 : vector<128x512xf32>
    %50 = vector.extract_strided_slice %44 {offsets = [0, 0], sizes = [256, 128], strides = [1, 1]} : vector<256x256xf32> to vector<256x128xf32>
    %51 = vector.extract_strided_slice %49 {offsets = [0, 0], sizes = [128, 128], strides = [1, 1]} : vector<128x512xf32> to vector<128x128xf32>
    %52 = vector.extract_strided_slice %49 {offsets = [0, 256], sizes = [128, 128], strides = [1, 1]} : vector<128x512xf32> to vector<128x128xf32>
    %cst_24 = arith.constant dense<0.000000e+00> : vector<256x128xf32>
    %53 = tpu.matmul %50, %51, %cst_24 {dimension_numbers = #tpu.dot_dimension_numbers<[1], [1], [0], [0], [0, 0, 1, 0], [], []>} : vector<256x128xf32>, vector<128x128xf32>, vector<256x128xf32> -> vector<256x128xf32>
    %cst_25 = arith.constant dense<0xFF800000> : vector<256xf32>
    %54 = vector.multi_reduction <maximumf>, %53, %cst_25 [1] : vector<256x128xf32> to vector<256xf32>
    %55 = vector.shape_cast %54 : vector<256xf32> to vector<256x1xf32>
    %56 = vector.broadcast %55 : vector<256x1xf32> to vector<256x128xf32>
    %57 = arith.subf %53, %56 : vector<256x128xf32>
    %58 = math.exp %57 : vector<256x128xf32>
    %cst_26 = arith.constant dense<0.000000e+00> : vector<256xf32>
    %59 = vector.multi_reduction <add>, %58, %cst_26 [1] : vector<256x128xf32> to vector<256xf32>
    %60 = vector.shape_cast %59 : vector<256xf32> to vector<256x1xf32>
    %cst_27 = arith.constant dense<0.000000e+00> : vector<256x128xf32>
    %61 = tpu.matmul %58, %52, %cst_27 {dimension_numbers = #tpu.dot_dimension_numbers<[1], [0], [0], [1], [0, 0, 1, 1], [], []>} : vector<256x128xf32>, vector<128x128xf32>, vector<256x128xf32> -> vector<256x128xf32>
    %62 = tpu.reciprocal %60 {approx = true} : vector<256x1xf32> -> vector<256x1xf32>
    %63 = vector.broadcast %62 : vector<256x1xf32> to vector<256x128xf32>
    %64 = arith.mulf %61, %63 : vector<256x128xf32>
    %c0_28 = arith.constant 0 : index
    %c0_29 = arith.constant 0 : index
    %65 = vector.load %arg7[%c0_28, %c0_29] : memref<64x256xf32, #tpu.memory_space<vmem>>, vector<64x128xf32>
    %cst_30 = arith.constant dense<0.000000e+00> : vector<64x256xf32>
    %66 = tpu.matmul %65, %64, %cst_30 {dimension_numbers = #tpu.dot_dimension_numbers<[1], [1], [0], [0], [0, 0, 1, 0], [], []>} : vector<64x128xf32>, vector<256x128xf32>, vector<64x256xf32> -> vector<64x256xf32>
    %67 = vector.extract_strided_slice %44 {offsets = [0, 128], sizes = [256, 128], strides = [1, 1]} : vector<256x256xf32> to vector<256x128xf32>
    %68 = vector.extract_strided_slice %49 {offsets = [0, 128], sizes = [128, 128], strides = [1, 1]} : vector<128x512xf32> to vector<128x128xf32>
    %69 = vector.extract_strided_slice %49 {offsets = [0, 384], sizes = [128, 128], strides = [1, 1]} : vector<128x512xf32> to vector<128x128xf32>
    %cst_31 = arith.constant dense<0.000000e+00> : vector<256x128xf32>
    %70 = tpu.matmul %67, %68, %cst_31 {dimension_numbers = #tpu.dot_dimension_numbers<[1], [1], [0], [0], [0, 0, 1, 0], [], []>} : vector<256x128xf32>, vector<128x128xf32>, vector<256x128xf32> -> vector<256x128xf32>
    %cst_32 = arith.constant dense<0xFF800000> : vector<256xf32>
    %71 = vector.multi_reduction <maximumf>, %70, %cst_32 [1] : vector<256x128xf32> to vector<256xf32>
    %72 = vector.shape_cast %71 : vector<256xf32> to vector<256x1xf32>
    %73 = vector.broadcast %72 : vector<256x1xf32> to vector<256x128xf32>
    %74 = arith.subf %70, %73 : vector<256x128xf32>
    %75 = math.exp %74 : vector<256x128xf32>
    %cst_33 = arith.constant dense<0.000000e+00> : vector<256xf32>
    %76 = vector.multi_reduction <add>, %75, %cst_33 [1] : vector<256x128xf32> to vector<256xf32>
    %77 = vector.shape_cast %76 : vector<256xf32> to vector<256x1xf32>
    %cst_34 = arith.constant dense<0.000000e+00> : vector<256x128xf32>
    %78 = tpu.matmul %75, %69, %cst_34 {dimension_numbers = #tpu.dot_dimension_numbers<[1], [0], [0], [1], [0, 0, 1, 1], [], []>} : vector<256x128xf32>, vector<128x128xf32>, vector<256x128xf32> -> vector<256x128xf32>
    %79 = tpu.reciprocal %77 {approx = true} : vector<256x1xf32> -> vector<256x1xf32>
    %80 = vector.broadcast %79 : vector<256x1xf32> to vector<256x128xf32>
    %81 = arith.mulf %78, %80 : vector<256x128xf32>
    %c0_35 = arith.constant 0 : index
    %c128 = arith.constant 128 : index
    %82 = vector.load %arg7[%c0_35, %c128] : memref<64x256xf32, #tpu.memory_space<vmem>>, vector<64x128xf32>
    %cst_36 = arith.constant dense<0.000000e+00> : vector<64x256xf32>
    %83 = tpu.matmul %82, %81, %cst_36 {dimension_numbers = #tpu.dot_dimension_numbers<[1], [1], [0], [0], [0, 0, 1, 0], [], []>} : vector<64x128xf32>, vector<256x128xf32>, vector<64x256xf32> -> vector<64x256xf32>
    %84 = arith.addf %66, %83 : vector<64x256xf32>
    %c0_37 = arith.constant 0 : index
    %c0_38 = arith.constant 0 : index
    %c0_39 = arith.constant 0 : index
    %85 = vector.load %arg8[%c0_37, %c0_38, %c0_39] : memref<1x64x256xf32, #tpu.memory_space<vmem>>, vector<1x64x256xf32>
    %86 = vector.shape_cast %85 : vector<1x64x256xf32> to vector<64x256xf32>
    %87 = vector.shape_cast %84 : vector<64x256xf32> to vector<1x64x256xf32>
    tpu.vector_store %arg8[%c0_37, %c0_38, %c0_39], %87 {strides = array<i32>} : memref<1x64x256xf32, #tpu.memory_space<vmem>>, vector<1x64x256xf32>,
    return
  }
  func.func @transform_0(%arg0: i32) -> (i32, i32, i32) {
    %c0_i32 = arith.constant 0 : i32
    %c0_i32_0 = arith.constant 0 : i32
    %c0_i32_1 = arith.constant 0 : i32
    return %arg0, %c0_i32, %c0_i32_0 : i32, i32, i32
  }
  func.func @transform_1(%arg0: i32) -> (i32, i32, i32) {
    %c0_i32 = arith.constant 0 : i32
    %c0_i32_0 = arith.constant 0 : i32
    %c0_i32_1 = arith.constant 0 : i32
    return %arg0, %c0_i32, %c0_i32_0 : i32, i32, i32
  }
  func.func @transform_2(%arg0: i32) -> (i32, i32) {
    %c0_i32 = arith.constant 0 : i32
    %c0_i32_0 = arith.constant 0 : i32
    %c0_i32_1 = arith.constant 0 : i32
    return %c0_i32, %c0_i32_0 : i32, i32
  }
  func.func @transform_3(%arg0: i32) -> (i32, i32) {
    %c0_i32 = arith.constant 0 : i32
    %c0_i32_0 = arith.constant 0 : i32
    %c0_i32_1 = arith.constant 0 : i32
    return %c0_i32, %c0_i32_0 : i32, i32
  }
  func.func @transform_4(%arg0: i32) -> (i32, i32) {
    %c0_i32 = arith.constant 0 : i32
    %c0_i32_0 = arith.constant 0 : i32
    %c0_i32_1 = arith.constant 0 : i32
    return %c0_i32, %c0_i32_0 : i32, i32
  }
  func.func @transform_5(%arg0: i32) -> (i32, i32) {
    %c0_i32 = arith.constant 0 : i32
    %c0_i32_0 = arith.constant 0 : i32
    %c0_i32_1 = arith.constant 0 : i32
    return %c0_i32, %c0_i32_0 : i32, i32
  }
  func.func @transform_6(%arg0: i32) -> (i32, i32) {
    %c0_i32 = arith.constant 0 : i32
    %c0_i32_0 = arith.constant 0 : i32
    %c0_i32_1 = arith.constant 0 : i32
    return %c0_i32, %c0_i32_0 : i32, i32
  }
  func.func @transform_7(%arg0: i32) -> (i32, i32, i32) {
    %c0_i32 = arith.constant 0 : i32
    %c0_i32_0 = arith.constant 0 : i32
    %c0_i32_1 = arith.constant 0 : i32
    return %arg0, %c0_i32, %c0_i32_0 : i32, i32, i32
  }
}

</mosaic_0001>

<llo_original>
// kernel: tpu_custom_call.1
$region0: #{tpu_custom_call.1}
  #allocation0 [shape = 'u32[]', space=smem, size = 0x4, offset = 0x4, fixed_abs, tag = 'smem constant byte address 0x4 - core index']
  #allocation1 [shape = 'u32[72,128]{1,0:T(1,128)}', space=vmem, size = 0x9000, scoped, tag = 'internal scratch']
  %s0 = inlined_call_operand.vmem [shape: f32[2,64,256], index: 0, kind: input, shape index: {}]
  %s1 = inlined_call_operand.vmem [shape: f32[2,128,64], index: 1, kind: input, shape index: {}]
  %s2 = inlined_call_operand.vmem [shape: f32[64,256], index: 2, kind: input, shape index: {}]
  %s3 = inlined_call_operand.hbm [shape: f32[1,256], index: 3, kind: input, shape index: {}]
  %s4 = inlined_call_operand.hbm [shape: f32[64,512], index: 4, kind: input, shape index: {}]
  %s5 = inlined_call_operand.vmem [shape: f32[1,512], index: 5, kind: input, shape index: {}]
  %s6 = inlined_call_operand.hbm [shape: f32[64,256], index: 6, kind: input, shape index: {}]
  %s7 = inlined_call_operand.hbm [shape: f32[2,64,256], index: 7, kind: output, shape index: {}]
  %s8 = sld [smem:[#allocation0]]
  $region73: #{tpu_custom_call.1} parent=0
    _
  %s10 = ssub.s32 1, %s8
  %s11 = scalar_select 0, %s10, %s8
  $region1: #{tpu_custom_call.1} parent=0
    #allocation2 [shape = 'u8[1024]{0}', space=vmem, size = 0x400, scoped, tag = 'input window, operand 3, single buffered']
    #allocation3 [shape = 's32[2]{0}', space=sflag, size = 0x8, scoped, tag = 'scoped memory for tpu_custom_call.1']
    #allocation4 [shape = 's32[2]{0}', space=sflag, size = 0x8, scoped, tag = 'scoped memory for tpu_custom_call.1']
    #allocation5 [shape = 'u8[131072]{0}', space=vmem, size = 0x20000, scoped, tag = 'input window, operand 4, single buffered']
    #allocation6 [shape = 's32[1]{0}', space=sflag, size = 0x4, scoped, tag = 'scoped memory for tpu_custom_call.1']
    #allocation7 [shape = 'u8[65536]{0}', space=vmem, size = 0x10000, scoped, tag = 'input window, operand 6, single buffered']
    #allocation8 [shape = 'u8[131072]{0}', space=vmem, size = 0x20000, scoped, tag = 'output window, operand 0']
    %12 = vsyncpa [#allocation3], 0
    %13 = vsyncpa [#allocation6], 0
    %14 = vsyncpa [#allocation4], 0
    %s15 = scalar_lea.sflag [#allocation4], 1
    %16 = vsyncpa %s15, 0
    loop: start=0, step=1, limit=4
    $region2: #{tpu_custom_call.1} parent=1 // loop_pre_header
      _
    $region3: #{tpu_custom_call.1} parent=1 // loop_header
      %s18 = sphi 0, %s22
      %p19 = scmp.ge.s32.totalorder %s18, 4
      %s28 = sphi 0, %s30
      %s31 = sphi 0, %s28
      %s32 = sphi 0, %s31
      %s48 = sphi 0, %s32
      %s54 = sphi 0, %s56
      %s57 = sphi 0, %s54
      %s58 = sphi 0, %s57
      %s74 = sphi 0, %s58
      %s78 = sphi 0, %s78
      %s80 = sphi 0, %s78
      %s81 = sphi 0, %s80
      %s95 = sphi 0, %s81
      %s99 = sphi 0, %s99
      %s101 = sphi 0, %s99
      %s102 = sphi 0, %s101
      %s116 = sphi 0, %s102
      %s120 = sphi 0, %s120
      %s122 = sphi 0, %s120
      %s123 = sphi 0, %s122
      %s137 = sphi 0, %s123
      %s141 = sphi 0, %s141
      %s143 = sphi 0, %s141
      %s144 = sphi 0, %s143
      %s158 = sphi 0, %s144
      %s162 = sphi 0, %s162
      %s164 = sphi 0, %s162
      %s165 = sphi 0, %s164
      %s179 = sphi 0, %s165
      %s185 = sphi 0, %s187
      %s188 = sphi 0, %s185
      %s189 = sphi 0, %s188
      %s205 = sphi 0, %s189
    $region4: #{tpu_custom_call.1} parent=1 // loop_header_branch
      %21 = sbr.rel (%p19) target = $region8
    $region5: #{tpu_custom_call.1} parent=1 // loop_body
      %s23 = ssub.s32 %s18, 1
      %s24 = ssub.s32 %s18, 2
      %s25 = sadd.s32 %s18, 1
      %s26 = ssub.s32 %s18, %s25
      %p27 = scmp.eq.s32.totalorder %s26, 0
      %s29 = sadd.s32 %s28, 1
      %s30 = scalar_select %p27, %s28, %s29
      %p33 = pneg %p27
      %p34 = scmp.eq.s32.totalorder %s18, 1
      %p35 = por %p33, %p34
      %p36 = scmp.ne.s32.totalorder %s28, %s31
      %p37 = scmp.eq.s32.totalorder %s18, 0
      %p38 = por %p36, %p37
      %p39 = scmp.ne.s32.totalorder %s28, %s31
      %p40 = scmp.eq.s32.totalorder %s23, 1
      %p41 = por %p39, %p40
      %p42 = scmp.ne.s32.totalorder %s31, %s32
      %p43 = scmp.eq.s32.totalorder %s23, 0
      %p44 = por %p42, %p43
      %p45 = scmp.ne.s32.totalorder %s31, %s32
      %p46 = scmp.eq.s32.totalorder %s24, 1
      %p47 = por %p45, %p46
      %p49 = scmp.ne.s32.totalorder %s32, %s48
      %p50 = scmp.eq.s32.totalorder %s24, 0
      %p51 = por %p49, %p50
      %s52 = ssub.s32 %s18, %s25
      %p53 = scmp.eq.s32.totalorder %s52, 0
      %s55 = sadd.s32 %s54, 1
      %s56 = scalar_select %p53, %s54, %s55
      %p59 = pneg %p53
      %p60 = scmp.eq.s32.totalorder %s18, 1
      %p61 = por %p59, %p60
      %p62 = scmp.ne.s32.totalorder %s54, %s57
      %p63 = scmp.eq.s32.totalorder %s18, 0
      %p64 = por %p62, %p63
      %p65 = scmp.ne.s32.totalorder %s54, %s57
      %p66 = scmp.eq.s32.totalorder %s23, 1
      %p67 = por %p65, %p66
      %p68 = scmp.ne.s32.totalorder %s57, %s58
      %p69 = scmp.eq.s32.totalorder %s23, 0
      %p70 = por %p68, %p69
      %p71 = scmp.ne.s32.totalorder %s57, %s58
      %p72 = scmp.eq.s32.totalorder %s24, 1
      %p73 = por %p71, %p72
      %p75 = scmp.ne.s32.totalorder %s58, %s74
      %p76 = scmp.eq.s32.totalorder %s24, 0
      %p77 = por %p75, %p76
      %s79 = sadd.s32 %s78, 1
      %p82 = scmp.eq.s32.totalorder %s18, 1
      %p83 = scmp.ne.s32.totalorder %s78, %s80
      %p84 = scmp.eq.s32.totalorder %s18, 0
      %p85 = por %p83, %p84
      %p86 = scmp.ne.s32.totalorder %s78, %s80
      %p87 = scmp.eq.s32.totalorder %s23, 1
      %p88 = por %p86, %p87
      %p89 = scmp.ne.s32.totalorder %s80, %s81
      %p90 = scmp.eq.s32.totalorder %s23, 0
      %p91 = por %p89, %p90
      %p92 = scmp.ne.s32.totalorder %s80, %s81
      %p93 = scmp.eq.s32.totalorder %s24, 1
      %p94 = por %p92, %p93
      %p96 = scmp.ne.s32.totalorder %s81, %s95
      %p97 = scmp.eq.s32.totalorder %s24, 0
      %p98 = por %p96, %p97
      %s100 = sadd.s32 %s99, 1
      %p103 = scmp.eq.s32.totalorder %s18, 1
      %p104 = scmp.ne.s32.totalorder %s99, %s101
      %p105 = scmp.eq.s32.totalorder %s18, 0
      %p106 = por %p104, %p105
      %p107 = scmp.ne.s32.totalorder %s99, %s101
      %p108 = scmp.eq.s32.totalorder %s23, 1
      %p109 = por %p107, %p108
      %p110 = scmp.ne.s32.totalorder %s101, %s102
      %p111 = scmp.eq.s32.totalorder %s23, 0
      %p112 = por %p110, %p111
      %p113 = scmp.ne.s32.totalorder %s101, %s102
      %p114 = scmp.eq.s32.totalorder %s24, 1
      %p115 = por %p113, %p114
      %p117 = scmp.ne.s32.totalorder %s102, %s116
      %p118 = scmp.eq.s32.totalorder %s24, 0
      %p119 = por %p117, %p118
      %s121 = sadd.s32 %s120, 1
      %p124 = scmp.eq.s32.totalorder %s18, 1
      %p125 = scmp.ne.s32.totalorder %s120, %s122
      %p126 = scmp.eq.s32.totalorder %s18, 0
      %p127 = por %p125, %p126
      %p128 = scmp.ne.s32.totalorder %s120, %s122
      %p129 = scmp.eq.s32.totalorder %s23, 1
      %p130 = por %p128, %p129
      %p131 = scmp.ne.s32.totalorder %s122, %s123
      %p132 = scmp.eq.s32.totalorder %s23, 0
      %p133 = por %p131, %p132
      %p134 = scmp.ne.s32.totalorder %s122, %s123
      %p135 = scmp.eq.s32.totalorder %s24, 1
      %p136 = por %p134, %p135
      %p138 = scmp.ne.s32.totalorder %s123, %s137
      %p139 = scmp.eq.s32.totalorder %s24, 0
      %p140 = por %p138, %p139
      %s142 = sadd.s32 %s141, 1
      %p145 = scmp.eq.s32.totalorder %s18, 1
      %p146 = scmp.ne.s32.totalorder %s141, %s143
      %p147 = scmp.eq.s32.totalorder %s18, 0
      %p148 = por %p146, %p147
      %p149 = scmp.ne.s32.totalorder %s141, %s143
      %p150 = scmp.eq.s32.totalorder %s23, 1
      %p151 = por %p149, %p150
      %p152 = scmp.ne.s32.totalorder %s143, %s144
      %p153 = scmp.eq.s32.totalorder %s23, 0
      %p154 = por %p152, %p153
      %p155 = scmp.ne.s32.totalorder %s143, %s144
      %p156 = scmp.eq.s32.totalorder %s24, 1
      %p157 = por %p155, %p156
      %p159 = scmp.ne.s32.totalorder %s144, %s158
      %p160 = scmp.eq.s32.totalorder %s24, 0
      %p161 = por %p159, %p160
      %s163 = sadd.s32 %s162, 1
      %p166 = scmp.eq.s32.totalorder %s18, 1
      %p167 = scmp.ne.s32.totalorder %s162, %s164
      %p168 = scmp.eq.s32.totalorder %s18, 0
      %p169 = por %p167, %p168
      %p170 = scmp.ne.s32.totalorder %s162, %s164
      %p171 = scmp.eq.s32.totalorder %s23, 1
      %p172 = por %p170, %p171
      %p173 = scmp.ne.s32.totalorder %s164, %s165
      %p174 = scmp.eq.s32.totalorder %s23, 0
      %p175 = por %p173, %p174
      %p176 = scmp.ne.s32.totalorder %s164, %s165
      %p177 = scmp.eq.s32.totalorder %s24, 1
      %p178 = por %p176, %p177
      %p180 = scmp.ne.s32.totalorder %s165, %s179
      %p181 = scmp.eq.s32.totalorder %s24, 0
      %p182 = por %p180, %p181
      %s183 = ssub.s32 %s18, %s25
      %p184 = scmp.eq.s32.totalorder %s183, 0
      %s186 = sadd.s32 %s185, 1
      %s187 = scalar_select %p184, %s185, %s186
      %p190 = pneg %p184
      %p191 = scmp.eq.s32.totalorder %s18, 1
      %p192 = por %p190, %p191
      %p193 = scmp.ne.s32.totalorder %s185, %s188
      %p194 = scmp.eq.s32.totalorder %s18, 0
      %p195 = por %p193, %p194
      %p196 = scmp.ne.s32.totalorder %s185, %s188
      %p197 = scmp.eq.s32.totalorder %s23, 1
      %p198 = por %p196, %p197
      %p199 = scmp.ne.s32.totalorder %s188, %s189
      %p200 = scmp.eq.s32.totalorder %s23, 0
      %p201 = por %p199, %p200
      %p202 = scmp.ne.s32.totalorder %s188, %s189
      %p203 = scmp.eq.s32.totalorder %s24, 1
      %p204 = por %p202, %p203
      %p206 = scmp.ne.s32.totalorder %s189, %s205
      %p207 = scmp.eq.s32.totalorder %s24, 0
      %p208 = por %p206, %p207
      %p209 = scmp.le.s32.totalorder 1, %s18
      %p210 = scmp.lt.s32.totalorder %s18, 3
      %p211 = pnand %p209, %p210
      %p212 = pneg %p211
      // Predicated region
      $region9: #{tpu_custom_call.1} parent=5 // pred_check
        _
      $region10: #{tpu_custom_call.1} parent=5 // pred_check_branch
        %214 = sbr.rel (%p211) target = $region12
      $region11: #{tpu_custom_call.1} parent=5 // pred_region
        %s215 = ssub.s32 %s18, 1
        // Predicated region
        $region13: #{tpu_custom_call.1} parent=11 // pred_check
          %p216 = pneg %p91
        $region14: #{tpu_custom_call.1} parent=11 // pred_check_branch
          %218 = sbr.rel (%p216) target = $region16
        $region15: #{tpu_custom_call.1} parent=11 // pred_region
          _
        $region16: #{tpu_custom_call.1} parent=11 // pred_fallthru
          _
        // Predicated region
        $region17: #{tpu_custom_call.1} parent=11 // pred_check
          %p219 = pneg %p112
        $region18: #{tpu_custom_call.1} parent=11 // pred_check_branch
          %221 = sbr.rel (%p219) target = $region20
        $region19: #{tpu_custom_call.1} parent=11 // pred_region
          %223 = vsyncadd [#allocation3], 0
          %s225 = sshll.u32 %s3, 4
          %s226 = int_to_ptr.hbm [resolvable:$true] %s225
          %s227 = sshll.u32 [#allocation2], 4
          %s228 = int_to_ptr.vmem [resolvable:$true] %s227
          %230 = dma.hbm_to_vmem [thread:$0]  %s226, 32, %s228, [#allocation3]
        $region20: #{tpu_custom_call.1} parent=11 // pred_fallthru
          _
        // Predicated region
        $region21: #{tpu_custom_call.1} parent=11 // pred_check
          %p231 = pneg %p133
        $region22: #{tpu_custom_call.1} parent=11 // pred_check_branch
          %233 = sbr.rel (%p231) target = $region24
        $region23: #{tpu_custom_call.1} parent=11 // pred_region
          %235 = vsyncadd [#allocation6], 0
          %s236 = sshll.u32 %s4, 4
          %s237 = int_to_ptr.hbm [resolvable:$true] %s236
          %s238 = sshll.u32 [#allocation5], 4
          %s239 = int_to_ptr.vmem [resolvable:$true] %s238
          %244 = dma.hbm_to_vmem [thread:$0]  %s237, 4096, %s239, [#allocation6], 512, 512, 32
        $region24: #{tpu_custom_call.1} parent=11 // pred_fallthru
          _
        // Predicated region
        $region25: #{tpu_custom_call.1} parent=11 // pred_check
          %p245 = pneg %p154
        $region26: #{tpu_custom_call.1} parent=11 // pred_check_branch
          %247 = sbr.rel (%p245) target = $region28
        $region27: #{tpu_custom_call.1} parent=11 // pred_region
          _
        $region28: #{tpu_custom_call.1} parent=11 // pred_fallthru
          _
        // Predicated region
        $region29: #{tpu_custom_call.1} parent=11 // pred_check
          %p248 = pneg %p175
        $region30: #{tpu_custom_call.1} parent=11 // pred_check_branch
          %250 = sbr.rel (%p248) target = $region32
        $region31: #{tpu_custom_call.1} parent=11 // pred_region
          %252 = vsyncadd [#allocation6], 0
          %s253 = sshll.u32 %s6, 4
          %s254 = int_to_ptr.hbm [resolvable:$true] %s253
          %s255 = sshll.u32 [#allocation7], 4
          %s256 = int_to_ptr.vmem [resolvable:$true] %s255
          %261 = dma.hbm_to_vmem [thread:$0]  %s254, 2048, %s256, [#allocation6], 256, 256, 16
        $region32: #{tpu_custom_call.1} parent=11 // pred_fallthru
          _
      $region12: #{tpu_custom_call.1} parent=5 // pred_fallthru
        _
      %p262 = scmp.lt.s32.totalorder %s18, 2
      // Predicated region
      $region33: #{tpu_custom_call.1} parent=5 // pred_check
        %p263 = pneg %p262
      $region34: #{tpu_custom_call.1} parent=5 // pred_check_branch
        %265 = sbr.rel (%p263) target = $region36
      $region35: #{tpu_custom_call.1} parent=5 // pred_region
        // Predicated region
        $region37: #{tpu_custom_call.1} parent=35 // pred_check
          %p266 = pneg %p38
        $region38: #{tpu_custom_call.1} parent=35 // pred_check_branch
          %268 = sbr.rel (%p266) target = $region40
        $region39: #{tpu_custom_call.1} parent=35 // pred_region
          %p269 = scmp.lt.s32.totalorder %s18, 1
          %s270 = scalar_select %p269, %s18, 1
          %s271 = smul.addr %s270, 16
          %s272 = smul.addr %s271, 8
          %s273 = scalar_lea.vmem %s0, %s272
        $region40: #{tpu_custom_call.1} parent=35 // pred_fallthru
          _
        // Predicated region
        $region41: #{tpu_custom_call.1} parent=35 // pred_check
          %p274 = pneg %p64
        $region42: #{tpu_custom_call.1} parent=35 // pred_check_branch
          %276 = sbr.rel (%p274) target = $region44
        $region43: #{tpu_custom_call.1} parent=35 // pred_region
          %p277 = scmp.lt.s32.totalorder %s18, 1
          %s278 = scalar_select %p277, %s18, 1
          %s279 = smul.addr %s278, 16
          %s280 = smul.addr %s279, 8
          %s281 = scalar_lea.vmem %s1, %s280
        $region44: #{tpu_custom_call.1} parent=35 // pred_fallthru
          _
      $region36: #{tpu_custom_call.1} parent=5 // pred_fallthru
        _
      %p282 = scmp.le.s32.totalorder 1, %s18
      %p283 = scmp.lt.s32.totalorder %s18, 3
      %p284 = pnand %p282, %p283
      %p285 = pneg %p284
      // Predicated region
      $region45: #{tpu_custom_call.1} parent=5 // pred_check
        _
      $region46: #{tpu_custom_call.1} parent=5 // pred_check_branch
        %287 = sbr.rel (%p284) target = $region48
      $region47: #{tpu_custom_call.1} parent=5 // pred_region
        %s288 = ssub.s32 %s18, 1
        // Predicated region
        $region49: #{tpu_custom_call.1} parent=47 // pred_check
          %p289 = pneg %p112
        $region50: #{tpu_custom_call.1} parent=47 // pred_check_branch
          %291 = sbr.rel (%p289) target = $region52
        $region51: #{tpu_custom_call.1} parent=47 // pred_region
          %293 = dma.done [#allocation3], 32
        $region52: #{tpu_custom_call.1} parent=47 // pred_fallthru
          _
        // Predicated region
        $region53: #{tpu_custom_call.1} parent=47 // pred_check
          %p294 = pneg %p133
        $region54: #{tpu_custom_call.1} parent=47 // pred_check_branch
          %296 = sbr.rel (%p294) target = $region56
        $region55: #{tpu_custom_call.1} parent=47 // pred_region
          %298 = dma.done [#allocation6], 4096
        $region56: #{tpu_custom_call.1} parent=47 // pred_fallthru
          _
        // Predicated region
        $region57: #{tpu_custom_call.1} parent=47 // pred_check
          %p299 = pneg %p175
        $region58: #{tpu_custom_call.1} parent=47 // pred_check_branch
          %301 = sbr.rel (%p299) target = $region60
        $region59: #{tpu_custom_call.1} parent=47 // pred_region
          %303 = dma.done [#allocation6], 2048
        $region60: #{tpu_custom_call.1} parent=47 // pred_fallthru
          _
        %p304 = scmp.lt.s32.totalorder %s23, 1
        %s305 = scalar_select %p304, %s23, 1
        %s306 = smul.addr %s305, 16
        %s307 = smul.addr %s306, 8
        %s308 = scalar_lea.vmem %s0, %s307
        %p309 = pneg %p44
        %p310 = pneg %p41
        %p311 = scmp.lt.s32.totalorder %s23, 1
        %s312 = scalar_select %p311, %s23, 1
        %s313 = smul.addr %s312, 16
        %s314 = smul.addr %s313, 8
        %s315 = scalar_lea.vmem %s1, %s314
        %p316 = pneg %p70
        %p317 = pneg %p67
        %p318 = pneg %p91
        %p319 = pneg %p88
        %p320 = pneg %p112
        %p321 = pneg %p109
        %p322 = pneg %p133
        %p323 = pneg %p130
        %p324 = pneg %p154
        %p325 = pneg %p151
        %p326 = pneg %p175
        %p327 = pneg %p172
        %p328 = pneg %p201
        %p329 = pneg %p198
        %s330 = sand.u32 %s188, 1
        %s331 = scalar_lea.sflag [#allocation4], %s330
        %s332 = sand.u32 %s188, 1
        %s333 = smul.addr %s332, 128
        %s334 = scalar_lea.vmem [#allocation8], %s333
        %p335 = scmp.lt.s32.totalorder %s23, 1
        %s336 = scalar_select %p335, %s23, 1
        %s337 = smul.addr %s336, 16
        %s338 = smul.addr %s337, 8
        %s339 = scalar_lea.vmem %s0, %s338
        %p340 = scmp.lt.s32.totalorder %s23, 1
        %s341 = scalar_select %p340, %s23, 1
        %s342 = smul.addr %s341, 16
        %s343 = smul.addr %s342, 8
        %s344 = scalar_lea.vmem %s1, %s343
        %v345 = vld [vmem:[%s339] sm:$0xff]
        %v346 = vld [vmem:[%s339 + $0x8] sm:$0xff]
        %v347 = vld [vmem:[%s339 + $0x10] sm:$0xff]
        %v348 = vld [vmem:[%s339 + $0x18] sm:$0xff]
        %v349 = vld [vmem:[%s339 + $0x20] sm:$0xff]
        %v350 = vld [vmem:[%s339 + $0x28] sm:$0xff]
        %v351 = vld [vmem:[%s339 + $0x30] sm:$0xff]
        %v352 = vld [vmem:[%s339 + $0x38] sm:$0xff]
        %v353 = vld [vmem:[%s339 + $0x40] sm:$0xff]
        %v354 = vld [vmem:[%s339 + $0x48] sm:$0xff]
        %v355 = vld [vmem:[%s339 + $0x50] sm:$0xff]
        %v356 = vld [vmem:[%s339 + $0x58] sm:$0xff]
        %v357 = vld [vmem:[%s339 + $0x60] sm:$0xff]
        %v358 = vld [vmem:[%s339 + $0x68] sm:$0xff]
        %v359 = vld [vmem:[%s339 + $0x70] sm:$0xff]
        %v360 = vld [vmem:[%s339 + $0x78] sm:$0xff]
        %v361 = vld [vmem:[%s344] sm:$0xff]
        %v362 = vld [vmem:[%s344 + $0x8] sm:$0xff]
        %v363 = vld [vmem:[%s344 + $0x10] sm:$0xff]
        %v364 = vld [vmem:[%s344 + $0x18] sm:$0xff]
        %v365 = vld [vmem:[%s344 + $0x20] sm:$0xff]
        %v366 = vld [vmem:[%s344 + $0x28] sm:$0xff]
        %v367 = vld [vmem:[%s344 + $0x30] sm:$0xff]
        %v368 = vld [vmem:[%s344 + $0x38] sm:$0xff]
        %v369 = vld [vmem:[%s344 + $0x40] sm:$0xff]
        %v370 = vld [vmem:[%s344 + $0x48] sm:$0xff]
        %v371 = vld [vmem:[%s344 + $0x50] sm:$0xff]
        %v372 = vld [vmem:[%s344 + $0x58] sm:$0xff]
        %v373 = vld [vmem:[%s344 + $0x60] sm:$0xff]
        %v374 = vld [vmem:[%s344 + $0x68] sm:$0xff]
        %v375 = vld [vmem:[%s344 + $0x70] sm:$0xff]
        %v376 = vld [vmem:[%s344 + $0x78] sm:$0xff]
        %v377 = vadd.f32 %v345, %v347
        %v378 = vadd.f32 %v377, %v349
        %v379 = vadd.f32 %v378, %v351
        %v380 = vadd.f32 %v379, %v353
        %v381 = vadd.f32 %v380, %v355
        %v382 = vadd.f32 %v381, %v357
        %v383 = vadd.f32 %v382, %v359
        %v384 = vrot.slane %v383, 4
        %v385 = vadd.f32 %v383, %v384
        %v386 = vrot.slane %v385, 2
        %v387 = vadd.f32 %v385, %v386
        %v388 = vrot.slane %v387, 1
        %v389 = vadd.f32 %v387, %v388
        %v390 = vadd.f32 %v346, %v348
        %v391 = vadd.f32 %v390, %v350
        %v392 = vadd.f32 %v391, %v352
        %v393 = vadd.f32 %v392, %v354
        %v394 = vadd.f32 %v393, %v356
        %v395 = vadd.f32 %v394, %v358
        %v396 = vadd.f32 %v395, %v360
        %v397 = vrot.slane %v396, 4
        %v398 = vadd.f32 %v396, %v397
        %v399 = vrot.slane %v398, 2
        %v400 = vadd.f32 %v398, %v399
        %v401 = vrot.slane %v400, 1
        %v402 = vadd.f32 %v400, %v401
        %v403 = vrcp.pop 64.0
        %v404 = vmul.f32 64.0, %v403
        %v405 = vsub.f32 1.0, %v404
        %v406 = vmul.f32 %v403, %v405
        %v407 = vadd.f32 %v403, %v406
        %vm408 = vweird.f32 %v403
        %v409 = vsel %vm408, %v403, %v407
        %v410 = vmul.f32 %v389, %v409
        %v411 = vmul.f32 %v402, %v409
        %v412 = vsub.f32 %v345, %v410
        %v413 = vsub.f32 %v346, %v411
        %v414 = vsub.f32 %v347, %v410
        %v415 = vsub.f32 %v348, %v411
        %v416 = vsub.f32 %v349, %v410
        %v417 = vsub.f32 %v350, %v411
        %v418 = vsub.f32 %v351, %v410
        %v419 = vsub.f32 %v352, %v411
        %v420 = vsub.f32 %v353, %v410
        %v421 = vsub.f32 %v354, %v411
        %v422 = vsub.f32 %v355, %v410
        %v423 = vsub.f32 %v356, %v411
        %v424 = vsub.f32 %v357, %v410
        %v425 = vsub.f32 %v358, %v411
        %v426 = vsub.f32 %v359, %v410
        %v427 = vsub.f32 %v360, %v411
        %v428 = vmul.f32 %v412, %v412
        %v429 = vmul.f32 %v413, %v413
        %v430 = vmul.f32 %v414, %v414
        %v431 = vmul.f32 %v415, %v415
        %v432 = vmul.f32 %v416, %v416
        %v433 = vmul.f32 %v417, %v417
        %v434 = vmul.f32 %v418, %v418
        %v435 = vmul.f32 %v419, %v419
        %v436 = vmul.f32 %v420, %v420
        %v437 = vmul.f32 %v421, %v421
        %v438 = vmul.f32 %v422, %v422
        %v439 = vmul.f32 %v423, %v423
        %v440 = vmul.f32 %v424, %v424
        %v441 = vmul.f32 %v425, %v425
        %v442 = vmul.f32 %v426, %v426
        %v443 = vmul.f32 %v427, %v427
        %v444 = vadd.f32 %v428, %v430
        %v445 = vadd.f32 %v444, %v432
        %v446 = vadd.f32 %v445, %v434
        %v447 = vadd.f32 %v446, %v436
        %v448 = vadd.f32 %v447, %v438
        %v449 = vadd.f32 %v448, %v440
        %v450 = vadd.f32 %v449, %v442
        %v451 = vrot.slane %v450, 4
        %v452 = vadd.f32 %v450, %v451
        %v453 = vrot.slane %v452, 2
        %v454 = vadd.f32 %v452, %v453
        %v455 = vrot.slane %v454, 1
        %v456 = vadd.f32 %v454, %v455
        %v457 = vadd.f32 %v429, %v431
        %v458 = vadd.f32 %v457, %v433
        %v459 = vadd.f32 %v458, %v435
        %v460 = vadd.f32 %v459, %v437
        %v461 = vadd.f32 %v460, %v439
        %v462 = vadd.f32 %v461, %v441
        %v463 = vadd.f32 %v462, %v443
        %v464 = vrot.slane %v463, 4
        %v465 = vadd.f32 %v463, %v464
        %v466 = vrot.slane %v465, 2
        %v467 = vadd.f32 %v465, %v466
        %v468 = vrot.slane %v467, 1
        %v469 = vadd.f32 %v467, %v468
        %v470 = vmul.f32 %v456, %v409
        %v471 = vmul.f32 %v469, %v409
        %v472 = vadd.f32 %v470, 1e-05
        %v473 = vadd.f32 %v471, 1e-05
        %v474 = vrsqrt.pop %v472
        %v475 = vmul.f32 %v474, %v472
        %v476 = vmul.f32 %v475, %v474
        %v477 = vmul.f32 0.5, %v476
        %v478 = vsub.f32 1.5, %v477
        %v479 = vmul.f32 %v474, %v478
        %vm480 = vweird.f32 %v472
        %vm481 = vweird.f32 %v474
        %vm482 = vmor %vm480, %vm481
        %v483 = vsel %vm482, %v474, %v479
        %v484 = vrsqrt.pop %v473
        %v485 = vmul.f32 %v484, %v473
        %v486 = vmul.f32 %v485, %v484
        %v487 = vmul.f32 0.5, %v486
        %v488 = vsub.f32 1.5, %v487
        %v489 = vmul.f32 %v484, %v488
        %vm490 = vweird.f32 %v473
        %vm491 = vweird.f32 %v484
        %vm492 = vmor %vm490, %vm491
        %v493 = vsel %vm492, %v484, %v489
        %v494 = vmul.f32 %v412, %v483
        %v495 = vmul.f32 %v413, %v493
        %v496 = vmul.f32 %v414, %v483
        %v497 = vmul.f32 %v415, %v493
        %v498 = vmul.f32 %v416, %v483
        %v499 = vmul.f32 %v417, %v493
        %v500 = vmul.f32 %v418, %v483
        %v501 = vmul.f32 %v419, %v493
        %v502 = vmul.f32 %v420, %v483
        %v503 = vmul.f32 %v421, %v493
        %v504 = vmul.f32 %v422, %v483
        %v505 = vmul.f32 %v423, %v493
        %v506 = vmul.f32 %v424, %v483
        %v507 = vmul.f32 %v425, %v493
        %v508 = vmul.f32 %v426, %v483
        %v509 = vmul.f32 %v427, %v493
        %vm510 = vcmask 523264
        %v511 = vsel %vm510, %v361, 0.0
        %512 = vadd.xlane.f32.xlu0 %v511
        %v513 = vpop.xlane.xlu0 %512
        %v514 = vsel %vm510, %v362, 0.0
        %515 = vadd.xlane.f32.xlu0 %v514
        %v516 = vpop.xlane.xlu0 %515
        %v517 = vsel %vm510, %v363, 0.0
        %518 = vadd.xlane.f32.xlu0 %v517
        %v519 = vpop.xlane.xlu0 %518
        %v520 = vsel %vm510, %v364, 0.0
        %521 = vadd.xlane.f32.xlu0 %v520
        %v522 = vpop.xlane.xlu0 %521
        %v523 = vsel %vm510, %v365, 0.0
        %524 = vadd.xlane.f32.xlu0 %v523
        %v525 = vpop.xlane.xlu0 %524
        %v526 = vsel %vm510, %v366, 0.0
        %527 = vadd.xlane.f32.xlu0 %v526
        %v528 = vpop.xlane.xlu0 %527
        %v529 = vsel %vm510, %v367, 0.0
        %530 = vadd.xlane.f32.xlu0 %v529
        %v531 = vpop.xlane.xlu0 %530
        %v532 = vsel %vm510, %v368, 0.0
        %533 = vadd.xlane.f32.xlu0 %v532
        %v534 = vpop.xlane.xlu0 %533
        %v535 = vsel %vm510, %v369, 0.0
        %536 = vadd.xlane.f32.xlu0 %v535
        %v537 = vpop.xlane.xlu0 %536
        %v538 = vsel %vm510, %v370, 0.0
        %539 = vadd.xlane.f32.xlu0 %v538
        %v540 = vpop.xlane.xlu0 %539
        %v541 = vsel %vm510, %v371, 0.0
        %542 = vadd.xlane.f32.xlu0 %v541
        %v543 = vpop.xlane.xlu0 %542
        %v544 = vsel %vm510, %v372, 0.0
        %545 = vadd.xlane.f32.xlu0 %v544
        %v546 = vpop.xlane.xlu0 %545
        %v547 = vsel %vm510, %v373, 0.0
        %548 = vadd.xlane.f32.xlu0 %v547
        %v549 = vpop.xlane.xlu0 %548
        %v550 = vsel %vm510, %v374, 0.0
        %551 = vadd.xlane.f32.xlu0 %v550
        %v552 = vpop.xlane.xlu0 %551
        %v553 = vsel %vm510, %v375, 0.0
        %554 = vadd.xlane.f32.xlu0 %v553
        %v555 = vpop.xlane.xlu0 %554
        %v556 = vsel %vm510, %v376, 0.0
        %557 = vadd.xlane.f32.xlu0 %v556
        %v558 = vpop.xlane.xlu0 %557
        %v559 = vmul.f32 %v513, %v409
        %v560 = vmul.f32 %v516, %v409
        %v561 = vmul.f32 %v519, %v409
        %v562 = vmul.f32 %v522, %v409
        %v563 = vmul.f32 %v525, %v409
        %v564 = vmul.f32 %v528, %v409
        %v565 = vmul.f32 %v531, %v409
        %v566 = vmul.f32 %v534, %v409
        %v567 = vmul.f32 %v537, %v409
        %v568 = vmul.f32 %v540, %v409
        %v569 = vmul.f32 %v543, %v409
        %v570 = vmul.f32 %v546, %v409
        %v571 = vmul.f32 %v549, %v409
        %v572 = vmul.f32 %v552, %v409
        %v573 = vmul.f32 %v555, %v409
        %v574 = vmul.f32 %v558, %v409
        %v575 = vsub.f32 %v361, %v559
        %v576 = vsub.f32 %v362, %v560
        %v577 = vsub.f32 %v363, %v561
        %v578 = vsub.f32 %v364, %v562
        %v579 = vsub.f32 %v365, %v563
        %v580 = vsub.f32 %v366, %v564
        %v581 = vsub.f32 %v367, %v565
        %v582 = vsub.f32 %v368, %v566
        %v583 = vsub.f32 %v369, %v567
        %v584 = vsub.f32 %v370, %v568
        %v585 = vsub.f32 %v371, %v569
        %v586 = vsub.f32 %v372, %v570
        %v587 = vsub.f32 %v373, %v571
        %v588 = vsub.f32 %v374, %v572
        %v589 = vsub.f32 %v375, %v573
        %v590 = vsub.f32 %v376, %v574
        %v591 = vmul.f32 %v575, %v575
        %v592 = vmul.f32 %v576, %v576
        %v593 = vmul.f32 %v577, %v577
        %v594 = vmul.f32 %v578, %v578
        %v595 = vmul.f32 %v579, %v579
        %v596 = vmul.f32 %v580, %v580
        %v597 = vmul.f32 %v581, %v581
        %v598 = vmul.f32 %v582, %v582
        %v599 = vmul.f32 %v583, %v583
        %v600 = vmul.f32 %v584, %v584
        %v601 = vmul.f32 %v585, %v585
        %v602 = vmul.f32 %v586, %v586
        %v603 = vmul.f32 %v587, %v587
        %v604 = vmul.f32 %v588, %v588
        %v605 = vmul.f32 %v589, %v589
        %v606 = vmul.f32 %v590, %v590
        %v607 = vsel %vm510, %v591, 0.0
        %608 = vadd.xlane.f32.xlu0 %v607
        %v609 = vpop.xlane.xlu0 %608
        %v610 = vsel %vm510, %v592, 0.0
        %611 = vadd.xlane.f32.xlu0 %v610
        %v612 = vpop.xlane.xlu0 %611
        %v613 = vsel %vm510, %v593, 0.0
        %614 = vadd.xlane.f32.xlu0 %v613
        %v615 = vpop.xlane.xlu0 %614
        %v616 = vsel %vm510, %v594, 0.0
        %617 = vadd.xlane.f32.xlu0 %v616
        %v618 = vpop.xlane.xlu0 %617
        %v619 = vsel %vm510, %v595, 0.0
        %620 = vadd.xlane.f32.xlu0 %v619
        %v621 = vpop.xlane.xlu0 %620
        %v622 = vsel %vm510, %v596, 0.0
        %623 = vadd.xlane.f32.xlu0 %v622
        %v624 = vpop.xlane.xlu0 %623
        %v625 = vsel %vm510, %v597, 0.0
        %626 = vadd.xlane.f32.xlu0 %v625
        %v627 = vpop.xlane.xlu0 %626
        %v628 = vsel %vm510, %v598, 0.0
        %629 = vadd.xlane.f32.xlu0 %v628
        %v630 = vpop.xlane.xlu0 %629
        %v631 = vsel %vm510, %v599, 0.0
        %632 = vadd.xlane.f32.xlu0 %v631
        %v633 = vpop.xlane.xlu0 %632
        %v634 = vsel %vm510, %v600, 0.0
        %635 = vadd.xlane.f32.xlu0 %v634
        %v636 = vpop.xlane.xlu0 %635
        %v637 = vsel %vm510, %v601, 0.0
        %638 = vadd.xlane.f32.xlu0 %v637
        %v639 = vpop.xlane.xlu0 %638
        %v640 = vsel %vm510, %v602, 0.0
        %641 = vadd.xlane.f32.xlu0 %v640
        %v642 = vpop.xlane.xlu0 %641
        %v643 = vsel %vm510, %v603, 0.0
        %644 = vadd.xlane.f32.xlu0 %v643
        %v645 = vpop.xlane.xlu0 %644
        %v646 = vsel %vm510, %v604, 0.0
        %647 = vadd.xlane.f32.xlu0 %v646
        %v648 = vpop.xlane.xlu0 %647
        %v649 = vsel %vm510, %v605, 0.0
        %650 = vadd.xlane.f32.xlu0 %v649
        %v651 = vpop.xlane.xlu0 %650
        %v652 = vsel %vm510, %v606, 0.0
        %653 = vadd.xlane.f32.xlu0 %v652
        %v654 = vpop.xlane.xlu0 %653
        %v655 = vmul.f32 %v609, %v409
        %v656 = vmul.f32 %v612, %v409
        %v657 = vmul.f32 %v615, %v409
        %v658 = vmul.f32 %v618, %v409
        %v659 = vmul.f32 %v621, %v409
        %v660 = vmul.f32 %v624, %v409
        %v661 = vmul.f32 %v627, %v409
        %v662 = vmul.f32 %v630, %v409
        %v663 = vmul.f32 %v633, %v409
        %v664 = vmul.f32 %v636, %v409
        %v665 = vmul.f32 %v639, %v409
        %v666 = vmul.f32 %v642, %v409
        %v667 = vmul.f32 %v645, %v409
        %v668 = vmul.f32 %v648, %v409
        %v669 = vmul.f32 %v651, %v409
        %v670 = vmul.f32 %v654, %v409
        %v671 = vadd.f32 %v655, 1e-05
        %v672 = vadd.f32 %v656, 1e-05
        %v673 = vadd.f32 %v657, 1e-05
        %v674 = vadd.f32 %v658, 1e-05
        %v675 = vadd.f32 %v659, 1e-05
        %v676 = vadd.f32 %v660, 1e-05
        %v677 = vadd.f32 %v661, 1e-05
        %v678 = vadd.f32 %v662, 1e-05
        %v679 = vadd.f32 %v663, 1e-05
        %v680 = vadd.f32 %v664, 1e-05
        %v681 = vadd.f32 %v665, 1e-05
        %v682 = vadd.f32 %v666, 1e-05
        %v683 = vadd.f32 %v667, 1e-05
        %v684 = vadd.f32 %v668, 1e-05
        %v685 = vadd.f32 %v669, 1e-05
        %v686 = vadd.f32 %v670, 1e-05
        %v687 = vrsqrt.pop %v671
        %v688 = vmul.f32 %v687, %v671
        %v689 = vmul.f32 %v688, %v687
        %v690 = vmul.f32 0.5, %v689
        %v691 = vsub.f32 1.5, %v690
        %v692 = vmul.f32 %v687, %v691
        %vm693 = vweird.f32 %v671
        %vm694 = vweird.f32 %v687
        %vm695 = vmor %vm693, %vm694
        %v696 = vsel %vm695, %v687, %v692
        %v697 = vrsqrt.pop %v672
        %v698 = vmul.f32 %v697, %v672
        %v699 = vmul.f32 %v698, %v697
        %v700 = vmul.f32 0.5, %v699
        %v701 = vsub.f32 1.5, %v700
        %v702 = vmul.f32 %v697, %v701
        %vm703 = vweird.f32 %v672
        %vm704 = vweird.f32 %v697
        %vm705 = vmor %vm703, %vm704
        %v706 = vsel %vm705, %v697, %v702
        %v707 = vrsqrt.pop %v673
        %v708 = vmul.f32 %v707, %v673
        %v709 = vmul.f32 %v708, %v707
        %v710 = vmul.f32 0.5, %v709
        %v711 = vsub.f32 1.5, %v710
        %v712 = vmul.f32 %v707, %v711
        %vm713 = vweird.f32 %v673
        %vm714 = vweird.f32 %v707
        %vm715 = vmor %vm713, %vm714
        %v716 = vsel %vm715, %v707, %v712
        %v717 = vrsqrt.pop %v674
        %v718 = vmul.f32 %v717, %v674
        %v719 = vmul.f32 %v718, %v717
        %v720 = vmul.f32 0.5, %v719
        %v721 = vsub.f32 1.5, %v720
        %v722 = vmul.f32 %v717, %v721
        %vm723 = vweird.f32 %v674
        %vm724 = vweird.f32 %v717
        %vm725 = vmor %vm723, %vm724
        %v726 = vsel %vm725, %v717, %v722
        %v727 = vrsqrt.pop %v675
        %v728 = vmul.f32 %v727, %v675
        %v729 = vmul.f32 %v728, %v727
        %v730 = vmul.f32 0.5, %v729
        %v731 = vsub.f32 1.5, %v730
        %v732 = vmul.f32 %v727, %v731
        %vm733 = vweird.f32 %v675
        %vm734 = vweird.f32 %v727
        %vm735 = vmor %vm733, %vm734
        %v736 = vsel %vm735, %v727, %v732
        %v737 = vrsqrt.pop %v676
        %v738 = vmul.f32 %v737, %v676
        %v739 = vmul.f32 %v738, %v737
        %v740 = vmul.f32 0.5, %v739
        %v741 = vsub.f32 1.5, %v740
        %v742 = vmul.f32 %v737, %v741
        %vm743 = vweird.f32 %v676
        %vm744 = vweird.f32 %v737
        %vm745 = vmor %vm743, %vm744
        %v746 = vsel %vm745, %v737, %v742
        %v747 = vrsqrt.pop %v677
        %v748 = vmul.f32 %v747, %v677
        %v749 = vmul.f32 %v748, %v747
        %v750 = vmul.f32 0.5, %v749
        %v751 = vsub.f32 1.5, %v750
        %v752 = vmul.f32 %v747, %v751
        %vm753 = vweird.f32 %v677
        %vm754 = vweird.f32 %v747
        %vm755 = vmor %vm753, %vm754
        %v756 = vsel %vm755, %v747, %v752
        %v757 = vrsqrt.pop %v678
        %v758 = vmul.f32 %v757, %v678
        %v759 = vmul.f32 %v758, %v757
        %v760 = vmul.f32 0.5, %v759
        %v761 = vsub.f32 1.5, %v760
        %v762 = vmul.f32 %v757, %v761
        %vm763 = vweird.f32 %v678
        %vm764 = vweird.f32 %v757
        %vm765 = vmor %vm763, %vm764
        %v766 = vsel %vm765, %v757, %v762
        %v767 = vrsqrt.pop %v679
        %v768 = vmul.f32 %v767, %v679
        %v769 = vmul.f32 %v768, %v767
        %v770 = vmul.f32 0.5, %v769
        %v771 = vsub.f32 1.5, %v770
        %v772 = vmul.f32 %v767, %v771
        %vm773 = vweird.f32 %v679
        %vm774 = vweird.f32 %v767
        %vm775 = vmor %vm773, %vm774
        %v776 = vsel %vm775, %v767, %v772
        %v777 = vrsqrt.pop %v680
        %v778 = vmul.f32 %v777, %v680
        %v779 = vmul.f32 %v778, %v777
        %v780 = vmul.f32 0.5, %v779
        %v781 = vsub.f32 1.5, %v780
        %v782 = vmul.f32 %v777, %v781
        %vm783 = vweird.f32 %v680
        %vm784 = vweird.f32 %v777
        %vm785 = vmor %vm783, %vm784
        %v786 = vsel %vm785, %v777, %v782
        %v787 = vrsqrt.pop %v681
        %v788 = vmul.f32 %v787, %v681
        %v789 = vmul.f32 %v788, %v787
        %v790 = vmul.f32 0.5, %v789
        %v791 = vsub.f32 1.5, %v790
        %v792 = vmul.f32 %v787, %v791
        %vm793 = vweird.f32 %v681
        %vm794 = vweird.f32 %v787
        %vm795 = vmor %vm793, %vm794
        %v796 = vsel %vm795, %v787, %v792
        %v797 = vrsqrt.pop %v682
        %v798 = vmul.f32 %v797, %v682
        %v799 = vmul.f32 %v798, %v797
        %v800 = vmul.f32 0.5, %v799
        %v801 = vsub.f32 1.5, %v800
        %v802 = vmul.f32 %v797, %v801
        %vm803 = vweird.f32 %v682
        %vm804 = vweird.f32 %v797
        %vm805 = vmor %vm803, %vm804
        %v806 = vsel %vm805, %v797, %v802
        %v807 = vrsqrt.pop %v683
        %v808 = vmul.f32 %v807, %v683
        %v809 = vmul.f32 %v808, %v807
        %v810 = vmul.f32 0.5, %v809
        %v811 = vsub.f32 1.5, %v810
        %v812 = vmul.f32 %v807, %v811
        %vm813 = vweird.f32 %v683
        %vm814 = vweird.f32 %v807
        %vm815 = vmor %vm813, %vm814
        %v816 = vsel %vm815, %v807, %v812
        %v817 = vrsqrt.pop %v684
        %v818 = vmul.f32 %v817, %v684
        %v819 = vmul.f32 %v818, %v817
        %v820 = vmul.f32 0.5, %v819
        %v821 = vsub.f32 1.5, %v820
        %v822 = vmul.f32 %v817, %v821
        %vm823 = vweird.f32 %v684
        %vm824 = vweird.f32 %v817
        %vm825 = vmor %vm823, %vm824
        %v826 = vsel %vm825, %v817, %v822
        %v827 = vrsqrt.pop %v685
        %v828 = vmul.f32 %v827, %v685
        %v829 = vmul.f32 %v828, %v827
        %v830 = vmul.f32 0.5, %v829
        %v831 = vsub.f32 1.5, %v830
        %v832 = vmul.f32 %v827, %v831
        %vm833 = vweird.f32 %v685
        %vm834 = vweird.f32 %v827
        %vm835 = vmor %vm833, %vm834
        %v836 = vsel %vm835, %v827, %v832
        %v837 = vrsqrt.pop %v686
        %v838 = vmul.f32 %v837, %v686
        %v839 = vmul.f32 %v838, %v837
        %v840 = vmul.f32 0.5, %v839
        %v841 = vsub.f32 1.5, %v840
        %v842 = vmul.f32 %v837, %v841
        %vm843 = vweird.f32 %v686
        %vm844 = vweird.f32 %v837
        %vm845 = vmor %vm843, %vm844
        %v846 = vsel %vm845, %v837, %v842
        %v847 = vmul.f32 %v575, %v696
        %v848 = vmul.f32 %v576, %v706
        %v849 = vmul.f32 %v577, %v716
        %v850 = vmul.f32 %v578, %v726
        %v851 = vmul.f32 %v579, %v736
        %v852 = vmul.f32 %v580, %v746
        %v853 = vmul.f32 %v581, %v756
        %v854 = vmul.f32 %v582, %v766
        %v855 = vmul.f32 %v583, %v776
        %v856 = vmul.f32 %v584, %v786
        %v857 = vmul.f32 %v585, %v796
        %v858 = vmul.f32 %v586, %v806
        %v859 = vmul.f32 %v587, %v816
        %v860 = vmul.f32 %v588, %v826
        %v861 = vmul.f32 %v589, %v836
        %v862 = vmul.f32 %v590, %v846
        %v863 = vld [vmem:[%s2] sm:$0xff]
        %v864 = vld [vmem:[%s2 + $0x8] sm:$0xff]
        %v865 = vld [vmem:[%s2 + $0x10] sm:$0xff]
        %v866 = vld [vmem:[%s2 + $0x18] sm:$0xff]
        %v867 = vld [vmem:[%s2 + $0x20] sm:$0xff]
        %v868 = vld [vmem:[%s2 + $0x28] sm:$0xff]
        %v869 = vld [vmem:[%s2 + $0x30] sm:$0xff]
        %v870 = vld [vmem:[%s2 + $0x38] sm:$0xff]
        %v871 = vld [vmem:[%s2 + $0x40] sm:$0xff]
        %v872 = vld [vmem:[%s2 + $0x48] sm:$0xff]
        %v873 = vld [vmem:[%s2 + $0x50] sm:$0xff]
        %v874 = vld [vmem:[%s2 + $0x58] sm:$0xff]
        %v875 = vld [vmem:[%s2 + $0x60] sm:$0xff]
        %v876 = vld [vmem:[%s2 + $0x68] sm:$0xff]
        %v877 = vld [vmem:[%s2 + $0x70] sm:$0xff]
        %v878 = vld [vmem:[%s2 + $0x78] sm:$0xff]
        %v879 = vld [vmem:[#allocation2] sm:$0x3]
        %v881 = vperm.slane %v879, 0
        %v882 = vperm.slane %v879, 1
        %885 = vxpose.xlu0.b32.start [1/16] %v494, 128
        %886 = vxpose.xlu0.b32.cont [2/16] %v496, 128
        %887 = vxpose.xlu0.b32.cont [3/16] %v498, 128
        %888 = vxpose.xlu0.b32.cont [4/16] %v500, 128
        %889 = vxpose.xlu0.b32.cont [5/16] %v502, 128
        %890 = vxpose.xlu0.b32.cont [6/16] %v504, 128
        %891 = vxpose.xlu0.b32.cont [7/16] %v506, 128
        %892 = vxpose.xlu0.b32.cont [8/16] %v508, 128
        %893 = vxpose.xlu0.b32.cont [9/16] 0.0, 128
        %894 = vxpose.xlu0.b32.cont [10/16] 0.0, 128
        %895 = vxpose.xlu0.b32.cont [11/16] 0.0, 128
        %896 = vxpose.xlu0.b32.cont [12/16] 0.0, 128
        %897 = vxpose.xlu0.b32.cont [13/16] 0.0, 128
        %898 = vxpose.xlu0.b32.cont [14/16] 0.0, 128
        %899 = vxpose.xlu0.b32.cont [15/16] 0.0, 128
        %900 = vxpose.xlu0.b32.end [16/16] 0.0, 128
        %v901 = vpop.trf.xlu0
        %v902 = vpop.trf.xlu0
        %v903 = vpop.trf.xlu0
        %v904 = vpop.trf.xlu0
        %v905 = vpop.trf.xlu0
        %v906 = vpop.trf.xlu0
        %v907 = vpop.trf.xlu0
        %v908 = vpop.trf.xlu0
        %v909 = vpop.trf.xlu0
        %v910 = vpop.trf.xlu0
        %v911 = vpop.trf.xlu0
        %v912 = vpop.trf.xlu0
        %v913 = vpop.trf.xlu0
        %v914 = vpop.trf.xlu0
        %v915 = vpop.trf.xlu0
        %v916 = vpop.trf.xlu0
        %917 = vxpose.xlu0.b32.start [1/16] %v495, 128
        %918 = vxpose.xlu0.b32.cont [2/16] %v497, 128
        %919 = vxpose.xlu0.b32.cont [3/16] %v499, 128
        %920 = vxpose.xlu0.b32.cont [4/16] %v501, 128
        %921 = vxpose.xlu0.b32.cont [5/16] %v503, 128
        %922 = vxpose.xlu0.b32.cont [6/16] %v505, 128
        %923 = vxpose.xlu0.b32.cont [7/16] %v507, 128
        %924 = vxpose.xlu0.b32.cont [8/16] %v509, 128
        %925 = vxpose.xlu0.b32.cont [9/16] 0.0, 128
        %926 = vxpose.xlu0.b32.cont [10/16] 0.0, 128
        %927 = vxpose.xlu0.b32.cont [11/16] 0.0, 128
        %928 = vxpose.xlu0.b32.cont [12/16] 0.0, 128
        %929 = vxpose.xlu0.b32.cont [13/16] 0.0, 128
        %930 = vxpose.xlu0.b32.cont [14/16] 0.0, 128
        %931 = vxpose.xlu0.b32.cont [15/16] 0.0, 128
        %932 = vxpose.xlu0.b32.end [16/16] 0.0, 128
        %v933 = vpop.trf.xlu0
        %v934 = vpop.trf.xlu0
        %v935 = vpop.trf.xlu0
        %v936 = vpop.trf.xlu0
        %v937 = vpop.trf.xlu0
        %v938 = vpop.trf.xlu0
        %v939 = vpop.trf.xlu0
        %v940 = vpop.trf.xlu0
        %v941 = vpop.trf.xlu0
        %v942 = vpop.trf.xlu0
        %v943 = vpop.trf.xlu0
        %v944 = vpop.trf.xlu0
        %v945 = vpop.trf.xlu0
        %v946 = vpop.trf.xlu0
        %v947 = vpop.trf.xlu0
        %v948 = vpop.trf.xlu0
        %v950 = vsel %vm510, %v901, 0
        %v953 = vsel %vm510, %v902, 0
        %v956 = vsel %vm510, %v903, 0
        %v959 = vsel %vm510, %v904, 0
        %v962 = vsel %vm510, %v905, 0
        %v965 = vsel %vm510, %v906, 0
        %v968 = vsel %vm510, %v907, 0
        %v971 = vsel %vm510, %v908, 0
        %v974 = vsel %vm510, %v909, 0
        %v977 = vsel %vm510, %v910, 0
        %v980 = vsel %vm510, %v911, 0
        %v983 = vsel %vm510, %v912, 0
        %v986 = vsel %vm510, %v913, 0
        %v989 = vsel %vm510, %v914, 0
        %v992 = vsel %vm510, %v915, 0
        %v995 = vsel %vm510, %v916, 0
        %v998 = vsel %vm510, %v933, 0
        %v1001 = vsel %vm510, %v934, 0
        %v1004 = vsel %vm510, %v935, 0
        %v1007 = vsel %vm510, %v936, 0
        %v1010 = vsel %vm510, %v937, 0
        %v1013 = vsel %vm510, %v938, 0
        %v1016 = vsel %vm510, %v939, 0
        %v1019 = vsel %vm510, %v940, 0
        %v1022 = vsel %vm510, %v941, 0
        %v1025 = vsel %vm510, %v942, 0
        %v1028 = vsel %vm510, %v943, 0
        %v1031 = vsel %vm510, %v944, 0
        %v1034 = vsel %vm510, %v945, 0
        %v1037 = vsel %vm510, %v946, 0
        %v1040 = vsel %vm510, %v947, 0
        %v1043 = vsel %vm510, %v948, 0
        %1045 = vmatpush.msra.mxu0 0.0
        %1046 = vmatpush.msra.mxu0 0.0
        %1047 = vmatpush.msra.mxu0 0.0
        %1048 = vmatpush.msra.mxu0 0.0
        %1049 = vmatpush.msra.mxu0 0.0
        %1050 = vmatpush.msra.mxu0 0.0
        %1051 = vmatpush.msra.mxu0 0.0
        %1052 = vmatpush.msra.mxu0 0.0
        %1053 = vmatpush.msra.mxu0 %v877
        %1054 = vmatpush.msra.mxu0 %v875
        %1055 = vmatpush.msra.mxu0 %v873
        %1056 = vmatpush.msra.mxu0 %v871
        %1057 = vmatpush.msra.mxu0 %v869
        %1058 = vmatpush.msra.mxu0 %v867
        %1059 = vmatpush.msra.mxu0 %v865
        %1060 = vmatpush.msra.mxu0 %v863
        %1061 = vmatmul.f32.gmra.mxu0 %v950
        %v1062 = vpop.f32.mrf.mxu0
        %v1063 = vadd.f32 %v881, %v1062
        %1064 = vmatmul.f32.gmra.mxu0 %v953
        %v1065 = vpop.f32.mrf.mxu0
        %v1066 = vadd.f32 %v881, %v1065
        %1067 = vmatmul.f32.gmra.mxu0 %v956
        %v1068 = vpop.f32.mrf.mxu0
        %v1069 = vadd.f32 %v881, %v1068
        %1070 = vmatmul.f32.gmra.mxu0 %v959
        %v1071 = vpop.f32.mrf.mxu0
        %v1072 = vadd.f32 %v881, %v1071
        %1073 = vmatmul.f32.gmra.mxu0 %v962
        %v1074 = vpop.f32.mrf.mxu0
        %v1075 = vadd.f32 %v881, %v1074
        %1076 = vmatmul.f32.gmra.mxu0 %v965
        %v1077 = vpop.f32.mrf.mxu0
        %v1078 = vadd.f32 %v881, %v1077
        %1079 = vmatmul.f32.gmra.mxu0 %v968
        %v1080 = vpop.f32.mrf.mxu0
        %v1081 = vadd.f32 %v881, %v1080
        %1082 = vmatmul.f32.gmra.mxu0 %v971
        %v1083 = vpop.f32.mrf.mxu0
        %v1084 = vadd.f32 %v881, %v1083
        %1085 = vmatmul.f32.gmra.mxu0 %v974
        %v1086 = vpop.f32.mrf.mxu0
        %v1087 = vadd.f32 %v881, %v1086
        %1088 = vmatmul.f32.gmra.mxu0 %v977
        %v1089 = vpop.f32.mrf.mxu0
        %v1090 = vadd.f32 %v881, %v1089
        %1091 = vmatmul.f32.gmra.mxu0 %v980
        %v1092 = vpop.f32.mrf.mxu0
        %v1093 = vadd.f32 %v881, %v1092
        %1094 = vmatmul.f32.gmra.mxu0 %v983
        %v1095 = vpop.f32.mrf.mxu0
        %v1096 = vadd.f32 %v881, %v1095
        %1097 = vmatmul.f32.gmra.mxu0 %v986
        %v1098 = vpop.f32.mrf.mxu0
        %v1099 = vadd.f32 %v881, %v1098
        %1100 = vmatmul.f32.gmra.mxu0 %v989
        %v1101 = vpop.f32.mrf.mxu0
        %v1102 = vadd.f32 %v881, %v1101
        %1103 = vmatmul.f32.gmra.mxu0 %v992
        %v1104 = vpop.f32.mrf.mxu0
        %v1105 = vadd.f32 %v881, %v1104
        %1106 = vmatmul.f32.gmra.mxu0 %v995
        %v1107 = vpop.f32.mrf.mxu0
        %v1108 = vadd.f32 %v881, %v1107
        %1109 = vmatmul.f32.gmra.mxu0 %v998
        %v1110 = vpop.f32.mrf.mxu0
        %v1111 = vadd.f32 %v881, %v1110
        %1112 = vmatmul.f32.gmra.mxu0 %v1001
        %v1113 = vpop.f32.mrf.mxu0
        %v1114 = vadd.f32 %v881, %v1113
        %1115 = vmatmul.f32.gmra.mxu0 %v1004
        %v1116 = vpop.f32.mrf.mxu0
        %v1117 = vadd.f32 %v881, %v1116
        %1118 = vmatmul.f32.gmra.mxu0 %v1007
        %v1119 = vpop.f32.mrf.mxu0
        %v1120 = vadd.f32 %v881, %v1119
        %1121 = vmatmul.f32.gmra.mxu0 %v1010
        %v1122 = vpop.f32.mrf.mxu0
        %v1123 = vadd.f32 %v881, %v1122
        %1124 = vmatmul.f32.gmra.mxu0 %v1013
        %v1125 = vpop.f32.mrf.mxu0
        %v1126 = vadd.f32 %v881, %v1125
        %1127 = vmatmul.f32.gmra.mxu0 %v1016
        %v1128 = vpop.f32.mrf.mxu0
        %v1129 = vadd.f32 %v881, %v1128
        %1130 = vmatmul.f32.gmra.mxu0 %v1019
        %v1131 = vpop.f32.mrf.mxu0
        %v1132 = vadd.f32 %v881, %v1131
        %1133 = vmatmul.f32.gmra.mxu0 %v1022
        %v1134 = vpop.f32.mrf.mxu0
        %v1135 = vadd.f32 %v881, %v1134
        %1136 = vmatmul.f32.gmra.mxu0 %v1025
        %v1137 = vpop.f32.mrf.mxu0
        %v1138 = vadd.f32 %v881, %v1137
        %1139 = vmatmul.f32.gmra.mxu0 %v1028
        %v1140 = vpop.f32.mrf.mxu0
        %v1141 = vadd.f32 %v881, %v1140
        %1142 = vmatmul.f32.gmra.mxu0 %v1031
        %v1143 = vpop.f32.mrf.mxu0
        %v1144 = vadd.f32 %v881, %v1143
        %1145 = vmatmul.f32.gmra.mxu0 %v1034
        %v1146 = vpop.f32.mrf.mxu0
        %v1147 = vadd.f32 %v881, %v1146
        %1148 = vmatmul.f32.gmra.mxu0 %v1037
        %v1149 = vpop.f32.mrf.mxu0
        %v1150 = vadd.f32 %v881, %v1149
        %1151 = vmatmul.f32.gmra.mxu0 %v1040
        %v1152 = vpop.f32.mrf.mxu0
        %v1153 = vadd.f32 %v881, %v1152
        %1154 = vmatmul.f32.gmra.mxu0 %v1043
        %v1155 = vpop.f32.mrf.mxu0
        %v1156 = vadd.f32 %v881, %v1155
        %1157 = vdwg.mxu0
        %1158 = vmatpush.msra.mxu0 0.0
        %1159 = vmatpush.msra.mxu0 0.0
        %1160 = vmatpush.msra.mxu0 0.0
        %1161 = vmatpush.msra.mxu0 0.0
        %1162 = vmatpush.msra.mxu0 0.0
        %1163 = vmatpush.msra.mxu0 0.0
        %1164 = vmatpush.msra.mxu0 0.0
        %1165 = vmatpush.msra.mxu0 0.0
        %1166 = vmatpush.msra.mxu0 %v878
        %1167 = vmatpush.msra.mxu0 %v876
        %1168 = vmatpush.msra.mxu0 %v874
        %1169 = vmatpush.msra.mxu0 %v872
        %1170 = vmatpush.msra.mxu0 %v870
        %1171 = vmatpush.msra.mxu0 %v868
        %1172 = vmatpush.msra.mxu0 %v866
        %1173 = vmatpush.msra.mxu0 %v864
        %1174 = vmatmul.f32.gmra.mxu0 %v950
        %v1175 = vpop.f32.mrf.mxu0
        %v1176 = vadd.f32 %v882, %v1175
        %1177 = vmatmul.f32.gmra.mxu0 %v953
        %v1178 = vpop.f32.mrf.mxu0
        %v1179 = vadd.f32 %v882, %v1178
        %1180 = vmatmul.f32.gmra.mxu0 %v956
        %v1181 = vpop.f32.mrf.mxu0
        %v1182 = vadd.f32 %v882, %v1181
        %1183 = vmatmul.f32.gmra.mxu0 %v959
        %v1184 = vpop.f32.mrf.mxu0
        %v1185 = vadd.f32 %v882, %v1184
        %1186 = vmatmul.f32.gmra.mxu0 %v962
        %v1187 = vpop.f32.mrf.mxu0
        %v1188 = vadd.f32 %v882, %v1187
        %1189 = vmatmul.f32.gmra.mxu0 %v965
        %v1190 = vpop.f32.mrf.mxu0
        %v1191 = vadd.f32 %v882, %v1190
        %1192 = vmatmul.f32.gmra.mxu0 %v968
        %v1193 = vpop.f32.mrf.mxu0
        %v1194 = vadd.f32 %v882, %v1193
        %1195 = vmatmul.f32.gmra.mxu0 %v971
        %v1196 = vpop.f32.mrf.mxu0
        %v1197 = vadd.f32 %v882, %v1196
        %1198 = vmatmul.f32.gmra.mxu0 %v974
        %v1199 = vpop.f32.mrf.mxu0
        %v1200 = vadd.f32 %v882, %v1199
        %1201 = vmatmul.f32.gmra.mxu0 %v977
        %v1202 = vpop.f32.mrf.mxu0
        %v1203 = vadd.f32 %v882, %v1202
        %1204 = vmatmul.f32.gmra.mxu0 %v980
        %v1205 = vpop.f32.mrf.mxu0
        %v1206 = vadd.f32 %v882, %v1205
        %1207 = vmatmul.f32.gmra.mxu0 %v983
        %v1208 = vpop.f32.mrf.mxu0
        %v1209 = vadd.f32 %v882, %v1208
        %1210 = vmatmul.f32.gmra.mxu0 %v986
        %v1211 = vpop.f32.mrf.mxu0
        %v1212 = vadd.f32 %v882, %v1211
        %1213 = vmatmul.f32.gmra.mxu0 %v989
        %v1214 = vpop.f32.mrf.mxu0
        %v1215 = vadd.f32 %v882, %v1214
        %1216 = vmatmul.f32.gmra.mxu0 %v992
        %v1217 = vpop.f32.mrf.mxu0
        %v1218 = vadd.f32 %v882, %v1217
        %1219 = vmatmul.f32.gmra.mxu0 %v995
        %v1220 = vpop.f32.mrf.mxu0
        %v1221 = vadd.f32 %v882, %v1220
        %1222 = vmatmul.f32.gmra.mxu0 %v998
        %v1223 = vpop.f32.mrf.mxu0
        %v1224 = vadd.f32 %v882, %v1223
        %1225 = vmatmul.f32.gmra.mxu0 %v1001
        %v1226 = vpop.f32.mrf.mxu0
        %v1227 = vadd.f32 %v882, %v1226
        %1228 = vmatmul.f32.gmra.mxu0 %v1004
        %v1229 = vpop.f32.mrf.mxu0
        %v1230 = vadd.f32 %v882, %v1229
        %1231 = vmatmul.f32.gmra.mxu0 %v1007
        %v1232 = vpop.f32.mrf.mxu0
        %v1233 = vadd.f32 %v882, %v1232
        %1234 = vmatmul.f32.gmra.mxu0 %v1010
        %v1235 = vpop.f32.mrf.mxu0
        %v1236 = vadd.f32 %v882, %v1235
        %1237 = vmatmul.f32.gmra.mxu0 %v1013
        %v1238 = vpop.f32.mrf.mxu0
        %v1239 = vadd.f32 %v882, %v1238
        %1240 = vmatmul.f32.gmra.mxu0 %v1016
        %v1241 = vpop.f32.mrf.mxu0
        %v1242 = vadd.f32 %v882, %v1241
        %1243 = vmatmul.f32.gmra.mxu0 %v1019
        %v1244 = vpop.f32.mrf.mxu0
        %v1245 = vadd.f32 %v882, %v1244
        %1246 = vmatmul.f32.gmra.mxu0 %v1022
        %v1247 = vpop.f32.mrf.mxu0
        %v1248 = vadd.f32 %v882, %v1247
        %1249 = vmatmul.f32.gmra.mxu0 %v1025
        %v1250 = vpop.f32.mrf.mxu0
        %v1251 = vadd.f32 %v882, %v1250
        %1252 = vmatmul.f32.gmra.mxu0 %v1028
        %v1253 = vpop.f32.mrf.mxu0
        %v1254 = vadd.f32 %v882, %v1253
        %1255 = vmatmul.f32.gmra.mxu0 %v1031
        %v1256 = vpop.f32.mrf.mxu0
        %v1257 = vadd.f32 %v882, %v1256
        %1258 = vmatmul.f32.gmra.mxu0 %v1034
        %v1259 = vpop.f32.mrf.mxu0
        %v1260 = vadd.f32 %v882, %v1259
        %1261 = vmatmul.f32.gmra.mxu0 %v1037
        %v1262 = vpop.f32.mrf.mxu0
        %v1263 = vadd.f32 %v882, %v1262
        %1264 = vmatmul.f32.gmra.mxu0 %v1040
        %v1265 = vpop.f32.mrf.mxu0
        %v1266 = vadd.f32 %v882, %v1265
        %1267 = vmatmul.f32.gmra.mxu0 %v1043
        %v1268 = vpop.f32.mrf.mxu0
        %v1269 = vadd.f32 %v882, %v1268
        %1270 = vdwg.mxu0
        %v1271 = vld [vmem:[#allocation5] sm:$0xff]
        %v1272 = vld [vmem:[#allocation5 + $0x8] sm:$0xff]
        %v1273 = vld [vmem:[#allocation5 + $0x10] sm:$0xff]
        %v1274 = vld [vmem:[#allocation5 + $0x18] sm:$0xff]
        %v1275 = vld [vmem:[#allocation5 + $0x20] sm:$0xff]
        %v1276 = vld [vmem:[#allocation5 + $0x28] sm:$0xff]
        %v1277 = vld [vmem:[#allocation5 + $0x30] sm:$0xff]
        %v1278 = vld [vmem:[#allocation5 + $0x38] sm:$0xff]
        %v1279 = vld [vmem:[#allocation5 + $0x40] sm:$0xff]
        %v1280 = vld [vmem:[#allocation5 + $0x48] sm:$0xff]
        %v1281 = vld [vmem:[#allocation5 + $0x50] sm:$0xff]
        %v1282 = vld [vmem:[#allocation5 + $0x58] sm:$0xff]
        %v1283 = vld [vmem:[#allocation5 + $0x60] sm:$0xff]
        %v1284 = vld [vmem:[#allocation5 + $0x68] sm:$0xff]
        %v1285 = vld [vmem:[#allocation5 + $0x70] sm:$0xff]
        %v1286 = vld [vmem:[#allocation5 + $0x78] sm:$0xff]
        %v1287 = vld [vmem:[#allocation5 + $0x80] sm:$0xff]
        %v1288 = vld [vmem:[#allocation5 + $0x88] sm:$0xff]
        %v1289 = vld [vmem:[#allocation5 + $0x90] sm:$0xff]
        %v1290 = vld [vmem:[#allocation5 + $0x98] sm:$0xff]
        %v1291 = vld [vmem:[#allocation5 + $0xa0] sm:$0xff]
        %v1292 = vld [vmem:[#allocation5 + $0xa8] sm:$0xff]
        %v1293 = vld [vmem:[#allocation5 + $0xb0] sm:$0xff]
        %v1294 = vld [vmem:[#allocation5 + $0xb8] sm:$0xff]
        %v1295 = vld [vmem:[#allocation5 + $0xc0] sm:$0xff]
        %v1296 = vld [vmem:[#allocation5 + $0xc8] sm:$0xff]
        %v1297 = vld [vmem:[#allocation5 + $0xd0] sm:$0xff]
        %v1298 = vld [vmem:[#allocation5 + $0xd8] sm:$0xff]
        %v1299 = vld [vmem:[#allocation5 + $0xe0] sm:$0xff]
        %v1300 = vld [vmem:[#allocation5 + $0xe8] sm:$0xff]
        %v1301 = vld [vmem:[#allocation5 + $0xf0] sm:$0xff]
        %v1302 = vld [vmem:[#allocation5 + $0xf8] sm:$0xff]
        %v1303 = vld [vmem:[%s5] sm:$0xf]
        %v1305 = vperm.slane %v1303, 0
        %v1306 = vperm.slane %v1303, 1
        %v1307 = vperm.slane %v1303, 2
        %v1308 = vperm.slane %v1303, 3
        %v1314 = vsel %vm510, %v847, 0
        %v1317 = vsel %vm510, %v848, 0
        %v1320 = vsel %vm510, %v849, 0
        %v1323 = vsel %vm510, %v850, 0
        %v1326 = vsel %vm510, %v851, 0
        %v1329 = vsel %vm510, %v852, 0
        %v1332 = vsel %vm510, %v853, 0
        %v1335 = vsel %vm510, %v854, 0
        %v1338 = vsel %vm510, %v855, 0
        %v1341 = vsel %vm510, %v856, 0
        %v1344 = vsel %vm510, %v857, 0
        %v1347 = vsel %vm510, %v858, 0
        %v1350 = vsel %vm510, %v859, 0
        %v1353 = vsel %vm510, %v860, 0
        %v1356 = vsel %vm510, %v861, 0
        %v1359 = vsel %vm510, %v862, 0
        %1361 = vmatpush.msra.mxu0 0.0
        %1362 = vmatpush.msra.mxu0 0.0
        %1363 = vmatpush.msra.mxu0 0.0
        %1364 = vmatpush.msra.mxu0 0.0
        %1365 = vmatpush.msra.mxu0 0.0
        %1366 = vmatpush.msra.mxu0 0.0
        %1367 = vmatpush.msra.mxu0 0.0
        %1368 = vmatpush.msra.mxu0 0.0
        %1369 = vmatpush.msra.mxu0 %v1299
        %1370 = vmatpush.msra.mxu0 %v1295
        %1371 = vmatpush.msra.mxu0 %v1291
        %1372 = vmatpush.msra.mxu0 %v1287
        %1373 = vmatpush.msra.mxu0 %v1283
        %1374 = vmatpush.msra.mxu0 %v1279
        %1375 = vmatpush.msra.mxu0 %v1275
        %1376 = vmatpush.msra.mxu0 %v1271
        %1377 = vmatmul.f32.gmra.mxu0 %v1314
        %v1378 = vpop.f32.mrf.mxu0
        %v1379 = vadd.f32 %v1305, %v1378
        %1380 = vmatmul.f32.gmra.mxu0 %v1317
        %v1381 = vpop.f32.mrf.mxu0
        %v1382 = vadd.f32 %v1305, %v1381
        %1383 = vmatmul.f32.gmra.mxu0 %v1320
        %v1384 = vpop.f32.mrf.mxu0
        %v1385 = vadd.f32 %v1305, %v1384
        %1386 = vmatmul.f32.gmra.mxu0 %v1323
        %v1387 = vpop.f32.mrf.mxu0
        %v1388 = vadd.f32 %v1305, %v1387
        %1389 = vmatmul.f32.gmra.mxu0 %v1326
        %v1390 = vpop.f32.mrf.mxu0
        %v1391 = vadd.f32 %v1305, %v1390
        %1392 = vmatmul.f32.gmra.mxu0 %v1329
        %v1393 = vpop.f32.mrf.mxu0
        %v1394 = vadd.f32 %v1305, %v1393
        %1395 = vmatmul.f32.gmra.mxu0 %v1332
        %v1396 = vpop.f32.mrf.mxu0
        %v1397 = vadd.f32 %v1305, %v1396
        %1398 = vmatmul.f32.gmra.mxu0 %v1335
        %v1399 = vpop.f32.mrf.mxu0
        %v1400 = vadd.f32 %v1305, %v1399
        %1401 = vmatmul.f32.gmra.mxu0 %v1338
        %v1402 = vpop.f32.mrf.mxu0
        %v1403 = vadd.f32 %v1305, %v1402
        %1404 = vmatmul.f32.gmra.mxu0 %v1341
        %v1405 = vpop.f32.mrf.mxu0
        %v1406 = vadd.f32 %v1305, %v1405
        %1407 = vmatmul.f32.gmra.mxu0 %v1344
        %v1408 = vpop.f32.mrf.mxu0
        %v1409 = vadd.f32 %v1305, %v1408
        %1410 = vmatmul.f32.gmra.mxu0 %v1347
        %v1411 = vpop.f32.mrf.mxu0
        %v1412 = vadd.f32 %v1305, %v1411
        %1413 = vmatmul.f32.gmra.mxu0 %v1350
        %v1414 = vpop.f32.mrf.mxu0
        %v1415 = vadd.f32 %v1305, %v1414
        %1416 = vmatmul.f32.gmra.mxu0 %v1353
        %v1417 = vpop.f32.mrf.mxu0
        %v1418 = vadd.f32 %v1305, %v1417
        %1419 = vmatmul.f32.gmra.mxu0 %v1356
        %v1420 = vpop.f32.mrf.mxu0
        %v1421 = vadd.f32 %v1305, %v1420
        %1422 = vmatmul.f32.gmra.mxu0 %v1359
        %v1423 = vpop.f32.mrf.mxu0
        %v1424 = vadd.f32 %v1305, %v1423
        %1425 = vdwg.mxu0
        %1426 = vmatpush.msra.mxu0 0.0
        %1427 = vmatpush.msra.mxu0 0.0
        %1428 = vmatpush.msra.mxu0 0.0
        %1429 = vmatpush.msra.mxu0 0.0
        %1430 = vmatpush.msra.mxu0 0.0
        %1431 = vmatpush.msra.mxu0 0.0
        %1432 = vmatpush.msra.mxu0 0.0
        %1433 = vmatpush.msra.mxu0 0.0
        %1434 = vmatpush.msra.mxu0 %v1300
        %1435 = vmatpush.msra.mxu0 %v1296
        %1436 = vmatpush.msra.mxu0 %v1292
        %1437 = vmatpush.msra.mxu0 %v1288
        %1438 = vmatpush.msra.mxu0 %v1284
        %1439 = vmatpush.msra.mxu0 %v1280
        %1440 = vmatpush.msra.mxu0 %v1276
        %1441 = vmatpush.msra.mxu0 %v1272
        %1442 = vmatmul.f32.gmra.mxu0 %v1314
        %v1443 = vpop.f32.mrf.mxu0
        %v1444 = vadd.f32 %v1306, %v1443
        %1445 = vmatmul.f32.gmra.mxu0 %v1317
        %v1446 = vpop.f32.mrf.mxu0
        %v1447 = vadd.f32 %v1306, %v1446
        %1448 = vmatmul.f32.gmra.mxu0 %v1320
        %v1449 = vpop.f32.mrf.mxu0
        %v1450 = vadd.f32 %v1306, %v1449
        %1451 = vmatmul.f32.gmra.mxu0 %v1323
        %v1452 = vpop.f32.mrf.mxu0
        %v1453 = vadd.f32 %v1306, %v1452
        %1454 = vmatmul.f32.gmra.mxu0 %v1326
        %v1455 = vpop.f32.mrf.mxu0
        %v1456 = vadd.f32 %v1306, %v1455
        %1457 = vmatmul.f32.gmra.mxu0 %v1329
        %v1458 = vpop.f32.mrf.mxu0
        %v1459 = vadd.f32 %v1306, %v1458
        %1460 = vmatmul.f32.gmra.mxu0 %v1332
        %v1461 = vpop.f32.mrf.mxu0
        %v1462 = vadd.f32 %v1306, %v1461
        %1463 = vmatmul.f32.gmra.mxu0 %v1335
        %v1464 = vpop.f32.mrf.mxu0
        %v1465 = vadd.f32 %v1306, %v1464
        %1466 = vmatmul.f32.gmra.mxu0 %v1338
        %v1467 = vpop.f32.mrf.mxu0
        %v1468 = vadd.f32 %v1306, %v1467
        %1469 = vmatmul.f32.gmra.mxu0 %v1341
        %v1470 = vpop.f32.mrf.mxu0
        %v1471 = vadd.f32 %v1306, %v1470
        %1472 = vmatmul.f32.gmra.mxu0 %v1344
        %v1473 = vpop.f32.mrf.mxu0
        %v1474 = vadd.f32 %v1306, %v1473
        %1475 = vmatmul.f32.gmra.mxu0 %v1347
        %v1476 = vpop.f32.mrf.mxu0
        %v1477 = vadd.f32 %v1306, %v1476
        %1478 = vmatmul.f32.gmra.mxu0 %v1350
        %v1479 = vpop.f32.mrf.mxu0
        %v1480 = vadd.f32 %v1306, %v1479
        %1481 = vmatmul.f32.gmra.mxu0 %v1353
        %v1482 = vpop.f32.mrf.mxu0
        %v1483 = vadd.f32 %v1306, %v1482
        %1484 = vmatmul.f32.gmra.mxu0 %v1356
        %v1485 = vpop.f32.mrf.mxu0
        %v1486 = vadd.f32 %v1306, %v1485
        %1487 = vmatmul.f32.gmra.mxu0 %v1359
        %v1488 = vpop.f32.mrf.mxu0
        %v1489 = vadd.f32 %v1306, %v1488
        %1490 = vdwg.mxu0
        %1491 = vmatpush.msra.mxu0 0.0
        %1492 = vmatpush.msra.mxu0 0.0
        %1493 = vmatpush.msra.mxu0 0.0
        %1494 = vmatpush.msra.mxu0 0.0
        %1495 = vmatpush.msra.mxu0 0.0
        %1496 = vmatpush.msra.mxu0 0.0
        %1497 = vmatpush.msra.mxu0 0.0
        %1498 = vmatpush.msra.mxu0 0.0
        %1499 = vmatpush.msra.mxu0 %v1301
        %1500 = vmatpush.msra.mxu0 %v1297
        %1501 = vmatpush.msra.mxu0 %v1293
        %1502 = vmatpush.msra.mxu0 %v1289
        %1503 = vmatpush.msra.mxu0 %v1285
        %1504 = vmatpush.msra.mxu0 %v1281
        %1505 = vmatpush.msra.mxu0 %v1277
        %1506 = vmatpush.msra.mxu0 %v1273
        %1507 = vmatmul.f32.gmra.mxu0 %v1314
        %v1508 = vpop.f32.mrf.mxu0
        %v1509 = vadd.f32 %v1307, %v1508
        %1510 = vmatmul.f32.gmra.mxu0 %v1317
        %v1511 = vpop.f32.mrf.mxu0
        %v1512 = vadd.f32 %v1307, %v1511
        %1513 = vmatmul.f32.gmra.mxu0 %v1320
        %v1514 = vpop.f32.mrf.mxu0
        %v1515 = vadd.f32 %v1307, %v1514
        %1516 = vmatmul.f32.gmra.mxu0 %v1323
        %v1517 = vpop.f32.mrf.mxu0
        %v1518 = vadd.f32 %v1307, %v1517
        %1519 = vmatmul.f32.gmra.mxu0 %v1326
        %v1520 = vpop.f32.mrf.mxu0
        %v1521 = vadd.f32 %v1307, %v1520
        %1522 = vmatmul.f32.gmra.mxu0 %v1329
        %v1523 = vpop.f32.mrf.mxu0
        %v1524 = vadd.f32 %v1307, %v1523
        %1525 = vmatmul.f32.gmra.mxu0 %v1332
        %v1526 = vpop.f32.mrf.mxu0
        %v1527 = vadd.f32 %v1307, %v1526
        %1528 = vmatmul.f32.gmra.mxu0 %v1335
        %v1529 = vpop.f32.mrf.mxu0
        %v1530 = vadd.f32 %v1307, %v1529
        %1531 = vmatmul.f32.gmra.mxu0 %v1338
        %v1532 = vpop.f32.mrf.mxu0
        %v1533 = vadd.f32 %v1307, %v1532
        %1534 = vmatmul.f32.gmra.mxu0 %v1341
        %v1535 = vpop.f32.mrf.mxu0
        %v1536 = vadd.f32 %v1307, %v1535
        %1537 = vmatmul.f32.gmra.mxu0 %v1344
        %v1538 = vpop.f32.mrf.mxu0
        %v1539 = vadd.f32 %v1307, %v1538
        %1540 = vmatmul.f32.gmra.mxu0 %v1347
        %v1541 = vpop.f32.mrf.mxu0
        %v1542 = vadd.f32 %v1307, %v1541
        %1543 = vmatmul.f32.gmra.mxu0 %v1350
        %v1544 = vpop.f32.mrf.mxu0
        %v1545 = vadd.f32 %v1307, %v1544
        %1546 = vmatmul.f32.gmra.mxu0 %v1353
        %v1547 = vpop.f32.mrf.mxu0
        %v1548 = vadd.f32 %v1307, %v1547
        %1549 = vmatmul.f32.gmra.mxu0 %v1356
        %v1550 = vpop.f32.mrf.mxu0
        %v1551 = vadd.f32 %v1307, %v1550
        %1552 = vmatmul.f32.gmra.mxu0 %v1359
        %v1553 = vpop.f32.mrf.mxu0
        %v1554 = vadd.f32 %v1307, %v1553
        %1555 = vdwg.mxu0
        %1556 = vmatpush.msra.mxu0 0.0
        %1557 = vmatpush.msra.mxu0 0.0
        %1558 = vmatpush.msra.mxu0 0.0
        %1559 = vmatpush.msra.mxu0 0.0
        %1560 = vmatpush.msra.mxu0 0.0
        %1561 = vmatpush.msra.mxu0 0.0
        %1562 = vmatpush.msra.mxu0 0.0
        %1563 = vmatpush.msra.mxu0 0.0
        %1564 = vmatpush.msra.mxu0 %v1302
        %1565 = vmatpush.msra.mxu0 %v1298
        %1566 = vmatpush.msra.mxu0 %v1294
        %1567 = vmatpush.msra.mxu0 %v1290
        %1568 = vmatpush.msra.mxu0 %v1286
        %1569 = vmatpush.msra.mxu0 %v1282
        %1570 = vmatpush.msra.mxu0 %v1278
        %1571 = vmatpush.msra.mxu0 %v1274
        %1572 = vmatmul.f32.gmra.mxu0 %v1314
        %v1573 = vpop.f32.mrf.mxu0
        %v1574 = vadd.f32 %v1308, %v1573
        %1575 = vmatmul.f32.gmra.mxu0 %v1317
        %v1576 = vpop.f32.mrf.mxu0
        %v1577 = vadd.f32 %v1308, %v1576
        %1578 = vmatmul.f32.gmra.mxu0 %v1320
        %v1579 = vpop.f32.mrf.mxu0
        %v1580 = vadd.f32 %v1308, %v1579
        %1581 = vmatmul.f32.gmra.mxu0 %v1323
        %v1582 = vpop.f32.mrf.mxu0
        %v1583 = vadd.f32 %v1308, %v1582
        %1584 = vmatmul.f32.gmra.mxu0 %v1326
        %v1585 = vpop.f32.mrf.mxu0
        %v1586 = vadd.f32 %v1308, %v1585
        %1587 = vmatmul.f32.gmra.mxu0 %v1329
        %v1588 = vpop.f32.mrf.mxu0
        %v1589 = vadd.f32 %v1308, %v1588
        %1590 = vmatmul.f32.gmra.mxu0 %v1332
        %v1591 = vpop.f32.mrf.mxu0
        %v1592 = vadd.f32 %v1308, %v1591
        %1593 = vmatmul.f32.gmra.mxu0 %v1335
        %v1594 = vpop.f32.mrf.mxu0
        %v1595 = vadd.f32 %v1308, %v1594
        %1596 = vmatmul.f32.gmra.mxu0 %v1338
        %v1597 = vpop.f32.mrf.mxu0
        %v1598 = vadd.f32 %v1308, %v1597
        %1599 = vmatmul.f32.gmra.mxu0 %v1341
        %v1600 = vpop.f32.mrf.mxu0
        %v1601 = vadd.f32 %v1308, %v1600
        %1602 = vmatmul.f32.gmra.mxu0 %v1344
        %v1603 = vpop.f32.mrf.mxu0
        %v1604 = vadd.f32 %v1308, %v1603
        %1605 = vmatmul.f32.gmra.mxu0 %v1347
        %v1606 = vpop.f32.mrf.mxu0
        %v1607 = vadd.f32 %v1308, %v1606
        %1608 = vmatmul.f32.gmra.mxu0 %v1350
        %v1609 = vpop.f32.mrf.mxu0
        %v1610 = vadd.f32 %v1308, %v1609
        %1611 = vmatmul.f32.gmra.mxu0 %v1353
        %v1612 = vpop.f32.mrf.mxu0
        %v1613 = vadd.f32 %v1308, %v1612
        %1614 = vmatmul.f32.gmra.mxu0 %v1356
        %v1615 = vpop.f32.mrf.mxu0
        %v1616 = vadd.f32 %v1308, %v1615
        %1617 = vmatmul.f32.gmra.mxu0 %v1359
        %v1618 = vpop.f32.mrf.mxu0
        %v1619 = vadd.f32 %v1308, %v1618
        %1620 = vdwg.mxu0
        %1621 = vmatpush.xpose.msra.mxu0 %v1424
        %1622 = vmatpush.xpose.msra.mxu0 %v1421
        %1623 = vmatpush.xpose.msra.mxu0 %v1418
        %1624 = vmatpush.xpose.msra.mxu0 %v1415
        %1625 = vmatpush.xpose.msra.mxu0 %v1412
        %1626 = vmatpush.xpose.msra.mxu0 %v1409
        %1627 = vmatpush.xpose.msra.mxu0 %v1406
        %1628 = vmatpush.xpose.msra.mxu0 %v1403
        %1629 = vmatpush.xpose.msra.mxu0 %v1400
        %1630 = vmatpush.xpose.msra.mxu0 %v1397
        %1631 = vmatpush.xpose.msra.mxu0 %v1394
        %1632 = vmatpush.xpose.msra.mxu0 %v1391
        %1633 = vmatpush.xpose.msra.mxu0 %v1388
        %1634 = vmatpush.xpose.msra.mxu0 %v1385
        %1635 = vmatpush.xpose.msra.mxu0 %v1382
        %1636 = vmatpush.xpose.msra.mxu0 %v1379
        %1637 = vmatmul.f32.gmra.mxu0 %v1063
        %v1638 = vpop.f32.mrf.mxu0
        %v1639 = vadd.f32 0.0, %v1638
        %1640 = vmatmul.f32.gmra.mxu0 %v1066
        %v1641 = vpop.f32.mrf.mxu0
        %v1642 = vadd.f32 0.0, %v1641
        %1643 = vmatmul.f32.gmra.mxu0 %v1069
        %v1644 = vpop.f32.mrf.mxu0
        %v1645 = vadd.f32 0.0, %v1644
        %1646 = vmatmul.f32.gmra.mxu0 %v1072
        %v1647 = vpop.f32.mrf.mxu0
        %v1648 = vadd.f32 0.0, %v1647
        %1649 = vmatmul.f32.gmra.mxu0 %v1075
        %v1650 = vpop.f32.mrf.mxu0
        %v1651 = vadd.f32 0.0, %v1650
        %1652 = vmatmul.f32.gmra.mxu0 %v1078
        %v1653 = vpop.f32.mrf.mxu0
        %v1654 = vadd.f32 0.0, %v1653
        %1655 = vmatmul.f32.gmra.mxu0 %v1081
        %v1656 = vpop.f32.mrf.mxu0
        %v1657 = vadd.f32 0.0, %v1656
        %1658 = vmatmul.f32.gmra.mxu0 %v1084
        %v1659 = vpop.f32.mrf.mxu0
        %v1660 = vadd.f32 0.0, %v1659
        %1661 = vmatmul.f32.gmra.mxu0 %v1087
        %v1662 = vpop.f32.mrf.mxu0
        %v1663 = vadd.f32 0.0, %v1662
        %1664 = vmatmul.f32.gmra.mxu0 %v1090
        %v1665 = vpop.f32.mrf.mxu0
        %v1666 = vadd.f32 0.0, %v1665
        %1667 = vmatmul.f32.gmra.mxu0 %v1093
        %v1668 = vpop.f32.mrf.mxu0
        %v1669 = vadd.f32 0.0, %v1668
        %1670 = vmatmul.f32.gmra.mxu0 %v1096
        %v1671 = vpop.f32.mrf.mxu0
        %v1672 = vadd.f32 0.0, %v1671
        %1673 = vmatmul.f32.gmra.mxu0 %v1099
        %v1674 = vpop.f32.mrf.mxu0
        %v1675 = vadd.f32 0.0, %v1674
        %1676 = vmatmul.f32.gmra.mxu0 %v1102
        %v1677 = vpop.f32.mrf.mxu0
        %v1678 = vadd.f32 0.0, %v1677
        %1679 = vmatmul.f32.gmra.mxu0 %v1105
        %v1680 = vpop.f32.mrf.mxu0
        %v1681 = vadd.f32 0.0, %v1680
        %1682 = vmatmul.f32.gmra.mxu0 %v1108
        %v1683 = vpop.f32.mrf.mxu0
        %v1684 = vadd.f32 0.0, %v1683
        %1685 = vmatmul.f32.gmra.mxu0 %v1111
        %v1686 = vpop.f32.mrf.mxu0
        %v1687 = vadd.f32 0.0, %v1686
        %1688 = vmatmul.f32.gmra.mxu0 %v1114
        %v1689 = vpop.f32.mrf.mxu0
        %v1690 = vadd.f32 0.0, %v1689
        %1691 = vmatmul.f32.gmra.mxu0 %v1117
        %v1692 = vpop.f32.mrf.mxu0
        %v1693 = vadd.f32 0.0, %v1692
        %1694 = vmatmul.f32.gmra.mxu0 %v1120
        %v1695 = vpop.f32.mrf.mxu0
        %v1696 = vadd.f32 0.0, %v1695
        %1697 = vmatmul.f32.gmra.mxu0 %v1123
        %v1698 = vpop.f32.mrf.mxu0
        %v1699 = vadd.f32 0.0, %v1698
        %1700 = vmatmul.f32.gmra.mxu0 %v1126
        %v1701 = vpop.f32.mrf.mxu0
        %v1702 = vadd.f32 0.0, %v1701
        %1703 = vmatmul.f32.gmra.mxu0 %v1129
        %v1704 = vpop.f32.mrf.mxu0
        %v1705 = vadd.f32 0.0, %v1704
        %1706 = vmatmul.f32.gmra.mxu0 %v1132
        %v1707 = vpop.f32.mrf.mxu0
        %v1708 = vadd.f32 0.0, %v1707
        %1709 = vmatmul.f32.gmra.mxu0 %v1135
        %v1710 = vpop.f32.mrf.mxu0
        %v1711 = vadd.f32 0.0, %v1710
        %1712 = vmatmul.f32.gmra.mxu0 %v1138
        %v1713 = vpop.f32.mrf.mxu0
        %v1714 = vadd.f32 0.0, %v1713
        %1715 = vmatmul.f32.gmra.mxu0 %v1141
        %v1716 = vpop.f32.mrf.mxu0
        %v1717 = vadd.f32 0.0, %v1716
        %1718 = vmatmul.f32.gmra.mxu0 %v1144
        %v1719 = vpop.f32.mrf.mxu0
        %v1720 = vadd.f32 0.0, %v1719
        %1721 = vmatmul.f32.gmra.mxu0 %v1147
        %v1722 = vpop.f32.mrf.mxu0
        %v1723 = vadd.f32 0.0, %v1722
        %1724 = vmatmul.f32.gmra.mxu0 %v1150
        %v1725 = vpop.f32.mrf.mxu0
        %v1726 = vadd.f32 0.0, %v1725
        %1727 = vmatmul.f32.gmra.mxu0 %v1153
        %v1728 = vpop.f32.mrf.mxu0
        %v1729 = vadd.f32 0.0, %v1728
        %1730 = vmatmul.f32.gmra.mxu0 %v1156
        %v1731 = vpop.f32.mrf.mxu0
        %v1732 = vadd.f32 0.0, %v1731
        %1733 = vdwg.mxu0
        %1734 = vmax.xlane.f32.xlu0 %v1639
        %v1735 = vpop.xlane.xlu0 %1734
        %1736 = vmax.xlane.f32.xlu0 %v1642
        %v1737 = vpop.xlane.xlu0 %1736
        %1738 = vmax.xlane.f32.xlu0 %v1645
        %v1739 = vpop.xlane.xlu0 %1738
        %1740 = vmax.xlane.f32.xlu0 %v1648
        %v1741 = vpop.xlane.xlu0 %1740
        %1742 = vmax.xlane.f32.xlu0 %v1651
        %v1743 = vpop.xlane.xlu0 %1742
        %1744 = vmax.xlane.f32.xlu0 %v1654
        %v1745 = vpop.xlane.xlu0 %1744
        %1746 = vmax.xlane.f32.xlu0 %v1657
        %v1747 = vpop.xlane.xlu0 %1746
        %1748 = vmax.xlane.f32.xlu0 %v1660
        %v1749 = vpop.xlane.xlu0 %1748
        %1750 = vmax.xlane.f32.xlu0 %v1663
        %v1751 = vpop.xlane.xlu0 %1750
        %1752 = vmax.xlane.f32.xlu0 %v1666
        %v1753 = vpop.xlane.xlu0 %1752
        %1754 = vmax.xlane.f32.xlu0 %v1669
        %v1755 = vpop.xlane.xlu0 %1754
        %1756 = vmax.xlane.f32.xlu0 %v1672
        %v1757 = vpop.xlane.xlu0 %1756
        %1758 = vmax.xlane.f32.xlu0 %v1675
        %v1759 = vpop.xlane.xlu0 %1758
        %1760 = vmax.xlane.f32.xlu0 %v1678
        %v1761 = vpop.xlane.xlu0 %1760
        %1762 = vmax.xlane.f32.xlu0 %v1681
        %v1763 = vpop.xlane.xlu0 %1762
        %1764 = vmax.xlane.f32.xlu0 %v1684
        %v1765 = vpop.xlane.xlu0 %1764
        %1766 = vmax.xlane.f32.xlu0 %v1687
        %v1767 = vpop.xlane.xlu0 %1766
        %1768 = vmax.xlane.f32.xlu0 %v1690
        %v1769 = vpop.xlane.xlu0 %1768
        %1770 = vmax.xlane.f32.xlu0 %v1693
        %v1771 = vpop.xlane.xlu0 %1770
        %1772 = vmax.xlane.f32.xlu0 %v1696
        %v1773 = vpop.xlane.xlu0 %1772
        %1774 = vmax.xlane.f32.xlu0 %v1699
        %v1775 = vpop.xlane.xlu0 %1774
        %1776 = vmax.xlane.f32.xlu0 %v1702
        %v1777 = vpop.xlane.xlu0 %1776
        %1778 = vmax.xlane.f32.xlu0 %v1705
        %v1779 = vpop.xlane.xlu0 %1778
        %1780 = vmax.xlane.f32.xlu0 %v1708
        %v1781 = vpop.xlane.xlu0 %1780
        %1782 = vmax.xlane.f32.xlu0 %v1711
        %v1783 = vpop.xlane.xlu0 %1782
        %1784 = vmax.xlane.f32.xlu0 %v1714
        %v1785 = vpop.xlane.xlu0 %1784
        %1786 = vmax.xlane.f32.xlu0 %v1717
        %v1787 = vpop.xlane.xlu0 %1786
        %1788 = vmax.xlane.f32.xlu0 %v1720
        %v1789 = vpop.xlane.xlu0 %1788
        %1790 = vmax.xlane.f32.xlu0 %v1723
        %v1791 = vpop.xlane.xlu0 %1790
        %1792 = vmax.xlane.f32.xlu0 %v1726
        %v1793 = vpop.xlane.xlu0 %1792
        %1794 = vmax.xlane.f32.xlu0 %v1729
        %v1795 = vpop.xlane.xlu0 %1794
        %1796 = vmax.xlane.f32.xlu0 %v1732
        %v1797 = vpop.xlane.xlu0 %1796
        %v1798 = vsub.f32 %v1639, %v1735
        %v1799 = vsub.f32 %v1642, %v1737
        %v1800 = vsub.f32 %v1645, %v1739
        %v1801 = vsub.f32 %v1648, %v1741
        %v1802 = vsub.f32 %v1651, %v1743
        %v1803 = vsub.f32 %v1654, %v1745
        %v1804 = vsub.f32 %v1657, %v1747
        %v1805 = vsub.f32 %v1660, %v1749
        %v1806 = vsub.f32 %v1663, %v1751
        %v1807 = vsub.f32 %v1666, %v1753
        %v1808 = vsub.f32 %v1669, %v1755
        %v1809 = vsub.f32 %v1672, %v1757
        %v1810 = vsub.f32 %v1675, %v1759
        %v1811 = vsub.f32 %v1678, %v1761
        %v1812 = vsub.f32 %v1681, %v1763
        %v1813 = vsub.f32 %v1684, %v1765
        %v1814 = vsub.f32 %v1687, %v1767
        %v1815 = vsub.f32 %v1690, %v1769
        %v1816 = vsub.f32 %v1693, %v1771
        %v1817 = vsub.f32 %v1696, %v1773
        %v1818 = vsub.f32 %v1699, %v1775
        %v1819 = vsub.f32 %v1702, %v1777
        %v1820 = vsub.f32 %v1705, %v1779
        %v1821 = vsub.f32 %v1708, %v1781
        %v1822 = vsub.f32 %v1711, %v1783
        %v1823 = vsub.f32 %v1714, %v1785
        %v1824 = vsub.f32 %v1717, %v1787
        %v1825 = vsub.f32 %v1720, %v1789
        %v1826 = vsub.f32 %v1723, %v1791
        %v1827 = vsub.f32 %v1726, %v1793
        %v1828 = vsub.f32 %v1729, %v1795
        %v1829 = vsub.f32 %v1732, %v1797
        %v1830 = vmul.f32 %v1798, 1.442695
        %v1831 = vpow.pop %v1830
        %v1832 = vmul.f32 %v1799, 1.442695
        %v1833 = vpow.pop %v1832
        %v1834 = vmul.f32 %v1800, 1.442695
        %v1835 = vpow.pop %v1834
        %v1836 = vmul.f32 %v1801, 1.442695
        %v1837 = vpow.pop %v1836
        %v1838 = vmul.f32 %v1802, 1.442695
        %v1839 = vpow.pop %v1838
        %v1840 = vmul.f32 %v1803, 1.442695
        %v1841 = vpow.pop %v1840
        %v1842 = vmul.f32 %v1804, 1.442695
        %v1843 = vpow.pop %v1842
        %v1844 = vmul.f32 %v1805, 1.442695
        %v1845 = vpow.pop %v1844
        %v1846 = vmul.f32 %v1806, 1.442695
        %v1847 = vpow.pop %v1846
        %v1848 = vmul.f32 %v1807, 1.442695
        %v1849 = vpow.pop %v1848
        %v1850 = vmul.f32 %v1808, 1.442695
        %v1851 = vpow.pop %v1850
        %v1852 = vmul.f32 %v1809, 1.442695
        %v1853 = vpow.pop %v1852
        %v1854 = vmul.f32 %v1810, 1.442695
        %v1855 = vpow.pop %v1854
        %v1856 = vmul.f32 %v1811, 1.442695
        %v1857 = vpow.pop %v1856
        %v1858 = vmul.f32 %v1812, 1.442695
        %v1859 = vpow.pop %v1858
        %v1860 = vmul.f32 %v1813, 1.442695
        %v1861 = vpow.pop %v1860
        %v1862 = vmul.f32 %v1814, 1.442695
        %v1863 = vpow.pop %v1862
        %v1864 = vmul.f32 %v1815, 1.442695
        %v1865 = vpow.pop %v1864
        %v1866 = vmul.f32 %v1816, 1.442695
        %v1867 = vpow.pop %v1866
        %v1868 = vmul.f32 %v1817, 1.442695
        %v1869 = vpow.pop %v1868
        %v1870 = vmul.f32 %v1818, 1.442695
        %v1871 = vpow.pop %v1870
        %v1872 = vmul.f32 %v1819, 1.442695
        %v1873 = vpow.pop %v1872
        %v1874 = vmul.f32 %v1820, 1.442695
        %v1875 = vpow.pop %v1874
        %v1876 = vmul.f32 %v1821, 1.442695
        %v1877 = vpow.pop %v1876
        %v1878 = vmul.f32 %v1822, 1.442695
        %v1879 = vpow.pop %v1878
        %v1880 = vmul.f32 %v1823, 1.442695
        %v1881 = vpow.pop %v1880
        %v1882 = vmul.f32 %v1824, 1.442695
        %v1883 = vpow.pop %v1882
        %v1884 = vmul.f32 %v1825, 1.442695
        %v1885 = vpow.pop %v1884
        %v1886 = vmul.f32 %v1826, 1.442695
        %v1887 = vpow.pop %v1886
        %v1888 = vmul.f32 %v1827, 1.442695
        %v1889 = vpow.pop %v1888
        %v1890 = vmul.f32 %v1828, 1.442695
        %v1891 = vpow.pop %v1890
        %v1892 = vmul.f32 %v1829, 1.442695
        %v1893 = vpow.pop %v1892
        %1894 = vadd.xlane.f32.xlu0 %v1831
        %v1895 = vpop.xlane.xlu0 %1894
        %1896 = vadd.xlane.f32.xlu0 %v1833
        %v1897 = vpop.xlane.xlu0 %1896
        %1898 = vadd.xlane.f32.xlu0 %v1835
        %v1899 = vpop.xlane.xlu0 %1898
        %1900 = vadd.xlane.f32.xlu0 %v1837
        %v1901 = vpop.xlane.xlu0 %1900
        %1902 = vadd.xlane.f32.xlu0 %v1839
        %v1903 = vpop.xlane.xlu0 %1902
        %1904 = vadd.xlane.f32.xlu0 %v1841
        %v1905 = vpop.xlane.xlu0 %1904
        %1906 = vadd.xlane.f32.xlu0 %v1843
        %v1907 = vpop.xlane.xlu0 %1906
        %1908 = vadd.xlane.f32.xlu0 %v1845
        %v1909 = vpop.xlane.xlu0 %1908
        %1910 = vadd.xlane.f32.xlu0 %v1847
        %v1911 = vpop.xlane.xlu0 %1910
        %1912 = vadd.xlane.f32.xlu0 %v1849
        %v1913 = vpop.xlane.xlu0 %1912
        %1914 = vadd.xlane.f32.xlu0 %v1851
        %v1915 = vpop.xlane.xlu0 %1914
        %1916 = vadd.xlane.f32.xlu0 %v1853
        %v1917 = vpop.xlane.xlu0 %1916
        %1918 = vadd.xlane.f32.xlu0 %v1855
        %v1919 = vpop.xlane.xlu0 %1918
        %1920 = vadd.xlane.f32.xlu0 %v1857
        %v1921 = vpop.xlane.xlu0 %1920
        %1922 = vadd.xlane.f32.xlu0 %v1859
        %v1923 = vpop.xlane.xlu0 %1922
        %1924 = vadd.xlane.f32.xlu0 %v1861
        %v1925 = vpop.xlane.xlu0 %1924
        %1926 = vadd.xlane.f32.xlu0 %v1863
        %v1927 = vpop.xlane.xlu0 %1926
        %1928 = vadd.xlane.f32.xlu0 %v1865
        %v1929 = vpop.xlane.xlu0 %1928
        %1930 = vadd.xlane.f32.xlu0 %v1867
        %v1931 = vpop.xlane.xlu0 %1930
        %1932 = vadd.xlane.f32.xlu0 %v1869
        %v1933 = vpop.xlane.xlu0 %1932
        %1934 = vadd.xlane.f32.xlu0 %v1871
        %v1935 = vpop.xlane.xlu0 %1934
        %1936 = vadd.xlane.f32.xlu0 %v1873
        %v1937 = vpop.xlane.xlu0 %1936
        %1938 = vadd.xlane.f32.xlu0 %v1875
        %v1939 = vpop.xlane.xlu0 %1938
        %1940 = vadd.xlane.f32.xlu0 %v1877
        %v1941 = vpop.xlane.xlu0 %1940
        %1942 = vadd.xlane.f32.xlu0 %v1879
        %v1943 = vpop.xlane.xlu0 %1942
        %1944 = vadd.xlane.f32.xlu0 %v1881
        %v1945 = vpop.xlane.xlu0 %1944
        %1946 = vadd.xlane.f32.xlu0 %v1883
        %v1947 = vpop.xlane.xlu0 %1946
        %1948 = vadd.xlane.f32.xlu0 %v1885
        %v1949 = vpop.xlane.xlu0 %1948
        %1950 = vadd.xlane.f32.xlu0 %v1887
        %v1951 = vpop.xlane.xlu0 %1950
        %1952 = vadd.xlane.f32.xlu0 %v1889
        %v1953 = vpop.xlane.xlu0 %1952
        %1954 = vadd.xlane.f32.xlu0 %v1891
        %v1955 = vpop.xlane.xlu0 %1954
        %1956 = vadd.xlane.f32.xlu0 %v1893
        %v1957 = vpop.xlane.xlu0 %1956
        %1958 = vmatpush.msra.mxu0 %v1554
        %1959 = vmatpush.msra.mxu0 %v1551
        %1960 = vmatpush.msra.mxu0 %v1548
        %1961 = vmatpush.msra.mxu0 %v1545
        %1962 = vmatpush.msra.mxu0 %v1542
        %1963 = vmatpush.msra.mxu0 %v1539
        %1964 = vmatpush.msra.mxu0 %v1536
        %1965 = vmatpush.msra.mxu0 %v1533
        %1966 = vmatpush.msra.mxu0 %v1530
        %1967 = vmatpush.msra.mxu0 %v1527
        %1968 = vmatpush.msra.mxu0 %v1524
        %1969 = vmatpush.msra.mxu0 %v1521
        %1970 = vmatpush.msra.mxu0 %v1518
        %1971 = vmatpush.msra.mxu0 %v1515
        %1972 = vmatpush.msra.mxu0 %v1512
        %1973 = vmatpush.msra.mxu0 %v1509
        %1974 = vmatmul.f32.gmra.mxu0 %v1831
        %v1975 = vpop.f32.mrf.mxu0
        %v1976 = vadd.f32 0.0, %v1975
        %1977 = vmatmul.f32.gmra.mxu0 %v1833
        %v1978 = vpop.f32.mrf.mxu0
        %v1979 = vadd.f32 0.0, %v1978
        %1980 = vmatmul.f32.gmra.mxu0 %v1835
        %v1981 = vpop.f32.mrf.mxu0
        %v1982 = vadd.f32 0.0, %v1981
        %1983 = vmatmul.f32.gmra.mxu0 %v1837
        %v1984 = vpop.f32.mrf.mxu0
        %v1985 = vadd.f32 0.0, %v1984
        %1986 = vmatmul.f32.gmra.mxu0 %v1839
        %v1987 = vpop.f32.mrf.mxu0
        %v1988 = vadd.f32 0.0, %v1987
        %1989 = vmatmul.f32.gmra.mxu0 %v1841
        %v1990 = vpop.f32.mrf.mxu0
        %v1991 = vadd.f32 0.0, %v1990
        %1992 = vmatmul.f32.gmra.mxu0 %v1843
        %v1993 = vpop.f32.mrf.mxu0
        %v1994 = vadd.f32 0.0, %v1993
        %1995 = vmatmul.f32.gmra.mxu0 %v1845
        %v1996 = vpop.f32.mrf.mxu0
        %v1997 = vadd.f32 0.0, %v1996
        %1998 = vmatmul.f32.gmra.mxu0 %v1847
        %v1999 = vpop.f32.mrf.mxu0
        %v2000 = vadd.f32 0.0, %v1999
        %2001 = vmatmul.f32.gmra.mxu0 %v1849
        %v2002 = vpop.f32.mrf.mxu0
        %v2003 = vadd.f32 0.0, %v2002
        %2004 = vmatmul.f32.gmra.mxu0 %v1851
        %v2005 = vpop.f32.mrf.mxu0
        %v2006 = vadd.f32 0.0, %v2005
        %2007 = vmatmul.f32.gmra.mxu0 %v1853
        %v2008 = vpop.f32.mrf.mxu0
        %v2009 = vadd.f32 0.0, %v2008
        %2010 = vmatmul.f32.gmra.mxu0 %v1855
        %v2011 = vpop.f32.mrf.mxu0
        %v2012 = vadd.f32 0.0, %v2011
        %2013 = vmatmul.f32.gmra.mxu0 %v1857
        %v2014 = vpop.f32.mrf.mxu0
        %v2015 = vadd.f32 0.0, %v2014
        %2016 = vmatmul.f32.gmra.mxu0 %v1859
        %v2017 = vpop.f32.mrf.mxu0
        %v2018 = vadd.f32 0.0, %v2017
        %2019 = vmatmul.f32.gmra.mxu0 %v1861
        %v2020 = vpop.f32.mrf.mxu0
        %v2021 = vadd.f32 0.0, %v2020
        %2022 = vmatmul.f32.gmra.mxu0 %v1863
        %v2023 = vpop.f32.mrf.mxu0
        %v2024 = vadd.f32 0.0, %v2023
        %2025 = vmatmul.f32.gmra.mxu0 %v1865
        %v2026 = vpop.f32.mrf.mxu0
        %v2027 = vadd.f32 0.0, %v2026
        %2028 = vmatmul.f32.gmra.mxu0 %v1867
        %v2029 = vpop.f32.mrf.mxu0
        %v2030 = vadd.f32 0.0, %v2029
        %2031 = vmatmul.f32.gmra.mxu0 %v1869
        %v2032 = vpop.f32.mrf.mxu0
        %v2033 = vadd.f32 0.0, %v2032
        %2034 = vmatmul.f32.gmra.mxu0 %v1871
        %v2035 = vpop.f32.mrf.mxu0
        %v2036 = vadd.f32 0.0, %v2035
        %2037 = vmatmul.f32.gmra.mxu0 %v1873
        %v2038 = vpop.f32.mrf.mxu0
        %v2039 = vadd.f32 0.0, %v2038
        %2040 = vmatmul.f32.gmra.mxu0 %v1875
        %v2041 = vpop.f32.mrf.mxu0
        %v2042 = vadd.f32 0.0, %v2041
        %2043 = vmatmul.f32.gmra.mxu0 %v1877
        %v2044 = vpop.f32.mrf.mxu0
        %v2045 = vadd.f32 0.0, %v2044
        %2046 = vmatmul.f32.gmra.mxu0 %v1879
        %v2047 = vpop.f32.mrf.mxu0
        %v2048 = vadd.f32 0.0, %v2047
        %2049 = vmatmul.f32.gmra.mxu0 %v1881
        %v2050 = vpop.f32.mrf.mxu0
        %v2051 = vadd.f32 0.0, %v2050
        %2052 = vmatmul.f32.gmra.mxu0 %v1883
        %v2053 = vpop.f32.mrf.mxu0
        %v2054 = vadd.f32 0.0, %v2053
        %2055 = vmatmul.f32.gmra.mxu0 %v1885
        %v2056 = vpop.f32.mrf.mxu0
        %v2057 = vadd.f32 0.0, %v2056
        %2058 = vmatmul.f32.gmra.mxu0 %v1887
        %v2059 = vpop.f32.mrf.mxu0
        %v2060 = vadd.f32 0.0, %v2059
        %2061 = vmatmul.f32.gmra.mxu0 %v1889
        %v2062 = vpop.f32.mrf.mxu0
        %v2063 = vadd.f32 0.0, %v2062
        %2064 = vmatmul.f32.gmra.mxu0 %v1891
        %v2065 = vpop.f32.mrf.mxu0
        %v2066 = vadd.f32 0.0, %v2065
        %2067 = vmatmul.f32.gmra.mxu0 %v1893
        %v2068 = vpop.f32.mrf.mxu0
        %v2069 = vadd.f32 0.0, %v2068
        %2070 = vdwg.mxu0
        %v2071 = vrcp.pop %v1895
        %v2072 = vrcp.pop %v1897
        %v2073 = vrcp.pop %v1899
        %v2074 = vrcp.pop %v1901
        %v2075 = vrcp.pop %v1903
        %v2076 = vrcp.pop %v1905
        %v2077 = vrcp.pop %v1907
        %v2078 = vrcp.pop %v1909
        %v2079 = vrcp.pop %v1911
        %v2080 = vrcp.pop %v1913
        %v2081 = vrcp.pop %v1915
        %v2082 = vrcp.pop %v1917
        %v2083 = vrcp.pop %v1919
        %v2084 = vrcp.pop %v1921
        %v2085 = vrcp.pop %v1923
        %v2086 = vrcp.pop %v1925
        %v2087 = vrcp.pop %v1927
        %v2088 = vrcp.pop %v1929
        %v2089 = vrcp.pop %v1931
        %v2090 = vrcp.pop %v1933
        %v2091 = vrcp.pop %v1935
        %v2092 = vrcp.pop %v1937
        %v2093 = vrcp.pop %v1939
        %v2094 = vrcp.pop %v1941
        %v2095 = vrcp.pop %v1943
        %v2096 = vrcp.pop %v1945
        %v2097 = vrcp.pop %v1947
        %v2098 = vrcp.pop %v1949
        %v2099 = vrcp.pop %v1951
        %v2100 = vrcp.pop %v1953
        %v2101 = vrcp.pop %v1955
        %v2102 = vrcp.pop %v1957
        %v2103 = vmul.f32 %v1976, %v2071
        %v2104 = vmul.f32 %v1979, %v2072
        %v2105 = vmul.f32 %v1982, %v2073
        %v2106 = vmul.f32 %v1985, %v2074
        %v2107 = vmul.f32 %v1988, %v2075
        %v2108 = vmul.f32 %v1991, %v2076
        %v2109 = vmul.f32 %v1994, %v2077
        %v2110 = vmul.f32 %v1997, %v2078
        %v2111 = vmul.f32 %v2000, %v2079
        %v2112 = vmul.f32 %v2003, %v2080
        %v2113 = vmul.f32 %v2006, %v2081
        %v2114 = vmul.f32 %v2009, %v2082
        %v2115 = vmul.f32 %v2012, %v2083
        %v2116 = vmul.f32 %v2015, %v2084
        %v2117 = vmul.f32 %v2018, %v2085
        %v2118 = vmul.f32 %v2021, %v2086
        %v2119 = vmul.f32 %v2024, %v2087
        %v2120 = vmul.f32 %v2027, %v2088
        %v2121 = vmul.f32 %v2030, %v2089
        %v2122 = vmul.f32 %v2033, %v2090
        %v2123 = vmul.f32 %v2036, %v2091
        %v2124 = vmul.f32 %v2039, %v2092
        %v2125 = vmul.f32 %v2042, %v2093
        %v2126 = vmul.f32 %v2045, %v2094
        %v2127 = vmul.f32 %v2048, %v2095
        %v2128 = vmul.f32 %v2051, %v2096
        %v2129 = vmul.f32 %v2054, %v2097
        %v2130 = vmul.f32 %v2057, %v2098
        %v2131 = vmul.f32 %v2060, %v2099
        %v2132 = vmul.f32 %v2063, %v2100
        %v2133 = vmul.f32 %v2066, %v2101
        %v2134 = vmul.f32 %v2069, %v2102
        %v2135 = vld [vmem:[#allocation7] sm:$0xff]
        %v2136 = vld [vmem:[#allocation7 + $0x10] sm:$0xff]
        %v2137 = vld [vmem:[#allocation7 + $0x20] sm:$0xff]
        %v2138 = vld [vmem:[#allocation7 + $0x30] sm:$0xff]
        %v2139 = vld [vmem:[#allocation7 + $0x40] sm:$0xff]
        %v2140 = vld [vmem:[#allocation7 + $0x50] sm:$0xff]
        %v2141 = vld [vmem:[#allocation7 + $0x60] sm:$0xff]
        %v2142 = vld [vmem:[#allocation7 + $0x70] sm:$0xff]
        %2143 = vmatpush.xpose.msra.mxu0 %v1489
        %2144 = vmatpush.xpose.msra.mxu0 %v1486
        %2145 = vmatpush.xpose.msra.mxu0 %v1483
        %2146 = vmatpush.xpose.msra.mxu0 %v1480
        %2147 = vmatpush.xpose.msra.mxu0 %v1477
        %2148 = vmatpush.xpose.msra.mxu0 %v1474
        %2149 = vmatpush.xpose.msra.mxu0 %v1471
        %2150 = vmatpush.xpose.msra.mxu0 %v1468
        %2151 = vmatpush.xpose.msra.mxu0 %v1465
        %2152 = vmatpush.xpose.msra.mxu0 %v1462
        %2153 = vmatpush.xpose.msra.mxu0 %v1459
        %2154 = vmatpush.xpose.msra.mxu0 %v1456
        %2155 = vmatpush.xpose.msra.mxu0 %v1453
        %2156 = vmatpush.xpose.msra.mxu0 %v1450
        %2157 = vmatpush.xpose.msra.mxu0 %v1447
        %2158 = vmatpush.xpose.msra.mxu0 %v1444
        %2159 = vmatmul.f32.gmra.mxu0 %v1176
        %v2160 = vpop.f32.mrf.mxu0
        %v2161 = vadd.f32 0.0, %v2160
        %2162 = vmatmul.f32.gmra.mxu0 %v1179
        %v2163 = vpop.f32.mrf.mxu0
        %v2164 = vadd.f32 0.0, %v2163
        %2165 = vmatmul.f32.gmra.mxu0 %v1182
        %v2166 = vpop.f32.mrf.mxu0
        %v2167 = vadd.f32 0.0, %v2166
        %2168 = vmatmul.f32.gmra.mxu0 %v1185
        %v2169 = vpop.f32.mrf.mxu0
        %v2170 = vadd.f32 0.0, %v2169
        %2171 = vmatmul.f32.gmra.mxu0 %v1188
        %v2172 = vpop.f32.mrf.mxu0
        %v2173 = vadd.f32 0.0, %v2172
        %2174 = vmatmul.f32.gmra.mxu0 %v1191
        %v2175 = vpop.f32.mrf.mxu0
        %v2176 = vadd.f32 0.0, %v2175
        %2177 = vmatmul.f32.gmra.mxu0 %v1194
        %v2178 = vpop.f32.mrf.mxu0
        %v2179 = vadd.f32 0.0, %v2178
        %2180 = vmatmul.f32.gmra.mxu0 %v1197
        %v2181 = vpop.f32.mrf.mxu0
        %v2182 = vadd.f32 0.0, %v2181
        %2183 = vmatmul.f32.gmra.mxu0 %v1200
        %v2184 = vpop.f32.mrf.mxu0
        %v2185 = vadd.f32 0.0, %v2184
        %2186 = vmatmul.f32.gmra.mxu0 %v1203
        %v2187 = vpop.f32.mrf.mxu0
        %v2188 = vadd.f32 0.0, %v2187
        %2189 = vmatmul.f32.gmra.mxu0 %v1206
        %v2190 = vpop.f32.mrf.mxu0
        %v2191 = vadd.f32 0.0, %v2190
        %2192 = vmatmul.f32.gmra.mxu0 %v1209
        %v2193 = vpop.f32.mrf.mxu0
        %v2194 = vadd.f32 0.0, %v2193
        %2195 = vmatmul.f32.gmra.mxu0 %v1212
        %v2196 = vpop.f32.mrf.mxu0
        %v2197 = vadd.f32 0.0, %v2196
        %2198 = vmatmul.f32.gmra.mxu0 %v1215
        %v2199 = vpop.f32.mrf.mxu0
        %v2200 = vadd.f32 0.0, %v2199
        %2201 = vmatmul.f32.gmra.mxu0 %v1218
        %v2202 = vpop.f32.mrf.mxu0
        %v2203 = vadd.f32 0.0, %v2202
        %2204 = vmatmul.f32.gmra.mxu0 %v1221
        %v2205 = vpop.f32.mrf.mxu0
        %v2206 = vadd.f32 0.0, %v2205
        %2207 = vmatmul.f32.gmra.mxu0 %v1224
        %v2208 = vpop.f32.mrf.mxu0
        %v2209 = vadd.f32 0.0, %v2208
        %2210 = vmatmul.f32.gmra.mxu0 %v1227
        %v2211 = vpop.f32.mrf.mxu0
        %v2212 = vadd.f32 0.0, %v2211
        %2213 = vmatmul.f32.gmra.mxu0 %v1230
        %v2214 = vpop.f32.mrf.mxu0
        %v2215 = vadd.f32 0.0, %v2214
        %2216 = vmatmul.f32.gmra.mxu0 %v1233
        %v2217 = vpop.f32.mrf.mxu0
        %v2218 = vadd.f32 0.0, %v2217
        %2219 = vmatmul.f32.gmra.mxu0 %v1236
        %v2220 = vpop.f32.mrf.mxu0
        %v2221 = vadd.f32 0.0, %v2220
        %2222 = vmatmul.f32.gmra.mxu0 %v1239
        %v2223 = vpop.f32.mrf.mxu0
        %v2224 = vadd.f32 0.0, %v2223
        %2225 = vmatmul.f32.gmra.mxu0 %v1242
        %v2226 = vpop.f32.mrf.mxu0
        %v2227 = vadd.f32 0.0, %v2226
        %2228 = vmatmul.f32.gmra.mxu0 %v1245
        %v2229 = vpop.f32.mrf.mxu0
        %v2230 = vadd.f32 0.0, %v2229
        %2231 = vmatmul.f32.gmra.mxu0 %v1248
        %v2232 = vpop.f32.mrf.mxu0
        %v2233 = vadd.f32 0.0, %v2232
        %2234 = vmatmul.f32.gmra.mxu0 %v1251
        %v2235 = vpop.f32.mrf.mxu0
        %v2236 = vadd.f32 0.0, %v2235
        %2237 = vmatmul.f32.gmra.mxu0 %v1254
        %v2238 = vpop.f32.mrf.mxu0
        %v2239 = vadd.f32 0.0, %v2238
        %2240 = vmatmul.f32.gmra.mxu0 %v1257
        %v2241 = vpop.f32.mrf.mxu0
        %v2242 = vadd.f32 0.0, %v2241
        %2243 = vmatmul.f32.gmra.mxu0 %v1260
        %v2244 = vpop.f32.mrf.mxu0
        %v2245 = vadd.f32 0.0, %v2244
        %2246 = vmatmul.f32.gmra.mxu0 %v1263
        %v2247 = vpop.f32.mrf.mxu0
        %v2248 = vadd.f32 0.0, %v2247
        %2249 = vmatmul.f32.gmra.mxu0 %v1266
        %v2250 = vpop.f32.mrf.mxu0
        %v2251 = vadd.f32 0.0, %v2250
        %2252 = vmatmul.f32.gmra.mxu0 %v1269
        %v2253 = vpop.f32.mrf.mxu0
        %v2254 = vadd.f32 0.0, %v2253
        %2255 = vdwg.mxu0
        %2256 = vmax.xlane.f32.xlu0 %v2161
        %v2257 = vpop.xlane.xlu0 %2256
        %2258 = vmax.xlane.f32.xlu0 %v2164
        %v2259 = vpop.xlane.xlu0 %2258
        %2260 = vmax.xlane.f32.xlu0 %v2167
        %v2261 = vpop.xlane.xlu0 %2260
        %2262 = vmax.xlane.f32.xlu0 %v2170
        %v2263 = vpop.xlane.xlu0 %2262
        %2264 = vmax.xlane.f32.xlu0 %v2173
        %v2265 = vpop.xlane.xlu0 %2264
        %2266 = vmax.xlane.f32.xlu0 %v2176
        %v2267 = vpop.xlane.xlu0 %2266
        %2268 = vmax.xlane.f32.xlu0 %v2179
        %v2269 = vpop.xlane.xlu0 %2268
        %2270 = vmax.xlane.f32.xlu0 %v2182
        %v2271 = vpop.xlane.xlu0 %2270
        %2272 = vmax.xlane.f32.xlu0 %v2185
        %v2273 = vpop.xlane.xlu0 %2272
        %2274 = vmax.xlane.f32.xlu0 %v2188
        %v2275 = vpop.xlane.xlu0 %2274
        %2276 = vmax.xlane.f32.xlu0 %v2191
        %v2277 = vpop.xlane.xlu0 %2276
        %2278 = vmax.xlane.f32.xlu0 %v2194
        %v2279 = vpop.xlane.xlu0 %2278
        %2280 = vmax.xlane.f32.xlu0 %v2197
        %v2281 = vpop.xlane.xlu0 %2280
        %2282 = vmax.xlane.f32.xlu0 %v2200
        %v2283 = vpop.xlane.xlu0 %2282
        %2284 = vmax.xlane.f32.xlu0 %v2203
        %v2285 = vpop.xlane.xlu0 %2284
        %2286 = vmax.xlane.f32.xlu0 %v2206
        %v2287 = vpop.xlane.xlu0 %2286
        %2288 = vmax.xlane.f32.xlu0 %v2209
        %v2289 = vpop.xlane.xlu0 %2288
        %2290 = vmax.xlane.f32.xlu0 %v2212
        %v2291 = vpop.xlane.xlu0 %2290
        %2292 = vmax.xlane.f32.xlu0 %v2215
        %v2293 = vpop.xlane.xlu0 %2292
        %2294 = vmax.xlane.f32.xlu0 %v2218
        %v2295 = vpop.xlane.xlu0 %2294
        %2296 = vmax.xlane.f32.xlu0 %v2221
        %v2297 = vpop.xlane.xlu0 %2296
        %2298 = vmax.xlane.f32.xlu0 %v2224
        %v2299 = vpop.xlane.xlu0 %2298
        %2300 = vmax.xlane.f32.xlu0 %v2227
        %v2301 = vpop.xlane.xlu0 %2300
        %2302 = vmax.xlane.f32.xlu0 %v2230
        %v2303 = vpop.xlane.xlu0 %2302
        %2304 = vmax.xlane.f32.xlu0 %v2233
        %v2305 = vpop.xlane.xlu0 %2304
        %2306 = vmax.xlane.f32.xlu0 %v2236
        %v2307 = vpop.xlane.xlu0 %2306
        %2308 = vmax.xlane.f32.xlu0 %v2239
        %v2309 = vpop.xlane.xlu0 %2308
        %2310 = vmax.xlane.f32.xlu0 %v2242
        %v2311 = vpop.xlane.xlu0 %2310
        %2312 = vmax.xlane.f32.xlu0 %v2245
        %v2313 = vpop.xlane.xlu0 %2312
        %2314 = vmax.xlane.f32.xlu0 %v2248
        %v2315 = vpop.xlane.xlu0 %2314
        %2316 = vmax.xlane.f32.xlu0 %v2251
        %v2317 = vpop.xlane.xlu0 %2316
        %2318 = vmax.xlane.f32.xlu0 %v2254
        %v2319 = vpop.xlane.xlu0 %2318
        %v2320 = vsub.f32 %v2161, %v2257
        %v2321 = vsub.f32 %v2164, %v2259
        %v2322 = vsub.f32 %v2167, %v2261
        %v2323 = vsub.f32 %v2170, %v2263
        %v2324 = vsub.f32 %v2173, %v2265
        %v2325 = vsub.f32 %v2176, %v2267
        %v2326 = vsub.f32 %v2179, %v2269
        %v2327 = vsub.f32 %v2182, %v2271
        %v2328 = vsub.f32 %v2185, %v2273
        %v2329 = vsub.f32 %v2188, %v2275
        %v2330 = vsub.f32 %v2191, %v2277
        %v2331 = vsub.f32 %v2194, %v2279
        %v2332 = vsub.f32 %v2197, %v2281
        %v2333 = vsub.f32 %v2200, %v2283
        %v2334 = vsub.f32 %v2203, %v2285
        %v2335 = vsub.f32 %v2206, %v2287
        %v2336 = vsub.f32 %v2209, %v2289
        %v2337 = vsub.f32 %v2212, %v2291
        %v2338 = vsub.f32 %v2215, %v2293
        %v2339 = vsub.f32 %v2218, %v2295
        %v2340 = vsub.f32 %v2221, %v2297
        %v2341 = vsub.f32 %v2224, %v2299
        %v2342 = vsub.f32 %v2227, %v2301
        %v2343 = vsub.f32 %v2230, %v2303
        %v2344 = vsub.f32 %v2233, %v2305
        %v2345 = vsub.f32 %v2236, %v2307
        %v2346 = vsub.f32 %v2239, %v2309
        %v2347 = vsub.f32 %v2242, %v2311
        %v2348 = vsub.f32 %v2245, %v2313
        %v2349 = vsub.f32 %v2248, %v2315
        %v2350 = vsub.f32 %v2251, %v2317
        %v2351 = vsub.f32 %v2254, %v2319
        %v2352 = vmul.f32 %v2320, 1.442695
        %v2353 = vpow.pop %v2352
        %v2354 = vmul.f32 %v2321, 1.442695
        %v2355 = vpow.pop %v2354
        %v2356 = vmul.f32 %v2322, 1.442695
        %v2357 = vpow.pop %v2356
        %v2358 = vmul.f32 %v2323, 1.442695
        %v2359 = vpow.pop %v2358
        %v2360 = vmul.f32 %v2324, 1.442695
        %v2361 = vpow.pop %v2360
        %v2362 = vmul.f32 %v2325, 1.442695
        %v2363 = vpow.pop %v2362
        %v2364 = vmul.f32 %v2326, 1.442695
        %v2365 = vpow.pop %v2364
        %v2366 = vmul.f32 %v2327, 1.442695
        %v2367 = vpow.pop %v2366
        %v2368 = vmul.f32 %v2328, 1.442695
        %v2369 = vpow.pop %v2368
        %v2370 = vmul.f32 %v2329, 1.442695
        %v2371 = vpow.pop %v2370
        %v2372 = vmul.f32 %v2330, 1.442695
        %v2373 = vpow.pop %v2372
        %v2374 = vmul.f32 %v2331, 1.442695
        %v2375 = vpow.pop %v2374
        %v2376 = vmul.f32 %v2332, 1.442695
        %v2377 = vpow.pop %v2376
        %v2378 = vmul.f32 %v2333, 1.442695
        %v2379 = vpow.pop %v2378
        %v2380 = vmul.f32 %v2334, 1.442695
        %v2381 = vpow.pop %v2380
        %v2382 = vmul.f32 %v2335, 1.442695
        %v2383 = vpow.pop %v2382
        %v2384 = vmul.f32 %v2336, 1.442695
        %v2385 = vpow.pop %v2384
        %v2386 = vmul.f32 %v2337, 1.442695
        %v2387 = vpow.pop %v2386
        %v2388 = vmul.f32 %v2338, 1.442695
        %v2389 = vpow.pop %v2388
        %v2390 = vmul.f32 %v2339, 1.442695
        %v2391 = vpow.pop %v2390
        %v2392 = vmul.f32 %v2340, 1.442695
        %v2393 = vpow.pop %v2392
        %v2394 = vmul.f32 %v2341, 1.442695
        %v2395 = vpow.pop %v2394
        %v2396 = vmul.f32 %v2342, 1.442695
        %v2397 = vpow.pop %v2396
        %v2398 = vmul.f32 %v2343, 1.442695
        %v2399 = vpow.pop %v2398
        %v2400 = vmul.f32 %v2344, 1.442695
        %v2401 = vpow.pop %v2400
        %v2402 = vmul.f32 %v2345, 1.442695
        %v2403 = vpow.pop %v2402
        %v2404 = vmul.f32 %v2346, 1.442695
        %v2405 = vpow.pop %v2404
        %v2406 = vmul.f32 %v2347, 1.442695
        %v2407 = vpow.pop %v2406
        %v2408 = vmul.f32 %v2348, 1.442695
        %v2409 = vpow.pop %v2408
        %v2410 = vmul.f32 %v2349, 1.442695
        %v2411 = vpow.pop %v2410
        %v2412 = vmul.f32 %v2350, 1.442695
        %v2413 = vpow.pop %v2412
        %v2414 = vmul.f32 %v2351, 1.442695
        %v2415 = vpow.pop %v2414
        %2416 = vadd.xlane.f32.xlu0 %v2353
        %v2417 = vpop.xlane.xlu0 %2416
        %2418 = vadd.xlane.f32.xlu0 %v2355
        %v2419 = vpop.xlane.xlu0 %2418
        %2420 = vadd.xlane.f32.xlu0 %v2357
        %v2421 = vpop.xlane.xlu0 %2420
        %2422 = vadd.xlane.f32.xlu0 %v2359
        %v2423 = vpop.xlane.xlu0 %2422
        %2424 = vadd.xlane.f32.xlu0 %v2361
        %v2425 = vpop.xlane.xlu0 %2424
        %2426 = vadd.xlane.f32.xlu0 %v2363
        %v2427 = vpop.xlane.xlu0 %2426
        %2428 = vadd.xlane.f32.xlu0 %v2365
        %v2429 = vpop.xlane.xlu0 %2428
        %2430 = vadd.xlane.f32.xlu0 %v2367
        %v2431 = vpop.xlane.xlu0 %2430
        %2432 = vadd.xlane.f32.xlu0 %v2369
        %v2433 = vpop.xlane.xlu0 %2432
        %2434 = vadd.xlane.f32.xlu0 %v2371
        %v2435 = vpop.xlane.xlu0 %2434
        %2436 = vadd.xlane.f32.xlu0 %v2373
        %v2437 = vpop.xlane.xlu0 %2436
        %2438 = vadd.xlane.f32.xlu0 %v2375
        %v2439 = vpop.xlane.xlu0 %2438
        %2440 = vadd.xlane.f32.xlu0 %v2377
        %v2441 = vpop.xlane.xlu0 %2440
        %2442 = vadd.xlane.f32.xlu0 %v2379
        %v2443 = vpop.xlane.xlu0 %2442
        %2444 = vadd.xlane.f32.xlu0 %v2381
        %v2445 = vpop.xlane.xlu0 %2444
        %2446 = vadd.xlane.f32.xlu0 %v2383
        %v2447 = vpop.xlane.xlu0 %2446
        %2448 = vadd.xlane.f32.xlu0 %v2385
        %v2449 = vpop.xlane.xlu0 %2448
        %2450 = vadd.xlane.f32.xlu0 %v2387
        %v2451 = vpop.xlane.xlu0 %2450
        %2452 = vadd.xlane.f32.xlu0 %v2389
        %v2453 = vpop.xlane.xlu0 %2452
        %2454 = vadd.xlane.f32.xlu0 %v2391
        %v2455 = vpop.xlane.xlu0 %2454
        %2456 = vadd.xlane.f32.xlu0 %v2393
        %v2457 = vpop.xlane.xlu0 %2456
        %2458 = vadd.xlane.f32.xlu0 %v2395
        %v2459 = vpop.xlane.xlu0 %2458
        %2460 = vadd.xlane.f32.xlu0 %v2397
        %v2461 = vpop.xlane.xlu0 %2460
        %2462 = vadd.xlane.f32.xlu0 %v2399
        %v2463 = vpop.xlane.xlu0 %2462
        %2464 = vadd.xlane.f32.xlu0 %v2401
        %v2465 = vpop.xlane.xlu0 %2464
        %2466 = vadd.xlane.f32.xlu0 %v2403
        %v2467 = vpop.xlane.xlu0 %2466
        %2468 = vadd.xlane.f32.xlu0 %v2405
        %v2469 = vpop.xlane.xlu0 %2468
        %2470 = vadd.xlane.f32.xlu0 %v2407
        %v2471 = vpop.xlane.xlu0 %2470
        %2472 = vadd.xlane.f32.xlu0 %v2409
        %v2473 = vpop.xlane.xlu0 %2472
        %2474 = vadd.xlane.f32.xlu0 %v2411
        %v2475 = vpop.xlane.xlu0 %2474
        %2476 = vadd.xlane.f32.xlu0 %v2413
        %v2477 = vpop.xlane.xlu0 %2476
        %2478 = vadd.xlane.f32.xlu0 %v2415
        %v2479 = vpop.xlane.xlu0 %2478
        %2480 = vmatpush.msra.mxu0 %v1619
        %2481 = vmatpush.msra.mxu0 %v1616
        %2482 = vmatpush.msra.mxu0 %v1613
        %2483 = vmatpush.msra.mxu0 %v1610
        %2484 = vmatpush.msra.mxu0 %v1607
        %2485 = vmatpush.msra.mxu0 %v1604
        %2486 = vmatpush.msra.mxu0 %v1601
        %2487 = vmatpush.msra.mxu0 %v1598
        %2488 = vmatpush.msra.mxu0 %v1595
        %2489 = vmatpush.msra.mxu0 %v1592
        %2490 = vmatpush.msra.mxu0 %v1589
        %2491 = vmatpush.msra.mxu0 %v1586
        %2492 = vmatpush.msra.mxu0 %v1583
        %2493 = vmatpush.msra.mxu0 %v1580
        %2494 = vmatpush.msra.mxu0 %v1577
        %2495 = vmatpush.msra.mxu0 %v1574
        %2496 = vmatmul.f32.gmra.mxu0 %v2353
        %v2497 = vpop.f32.mrf.mxu0
        %v2498 = vadd.f32 0.0, %v2497
        %2499 = vmatmul.f32.gmra.mxu0 %v2355
        %v2500 = vpop.f32.mrf.mxu0
        %v2501 = vadd.f32 0.0, %v2500
        %2502 = vmatmul.f32.gmra.mxu0 %v2357
        %v2503 = vpop.f32.mrf.mxu0
        %v2504 = vadd.f32 0.0, %v2503
        %2505 = vmatmul.f32.gmra.mxu0 %v2359
        %v2506 = vpop.f32.mrf.mxu0
        %v2507 = vadd.f32 0.0, %v2506
        %2508 = vmatmul.f32.gmra.mxu0 %v2361
        %v2509 = vpop.f32.mrf.mxu0
        %v2510 = vadd.f32 0.0, %v2509
        %2511 = vmatmul.f32.gmra.mxu0 %v2363
        %v2512 = vpop.f32.mrf.mxu0
        %v2513 = vadd.f32 0.0, %v2512
        %2514 = vmatmul.f32.gmra.mxu0 %v2365
        %v2515 = vpop.f32.mrf.mxu0
        %v2516 = vadd.f32 0.0, %v2515
        %2517 = vmatmul.f32.gmra.mxu0 %v2367
        %v2518 = vpop.f32.mrf.mxu0
        %v2519 = vadd.f32 0.0, %v2518
        %2520 = vmatmul.f32.gmra.mxu0 %v2369
        %v2521 = vpop.f32.mrf.mxu0
        %v2522 = vadd.f32 0.0, %v2521
        %2523 = vmatmul.f32.gmra.mxu0 %v2371
        %v2524 = vpop.f32.mrf.mxu0
        %v2525 = vadd.f32 0.0, %v2524
        %2526 = vmatmul.f32.gmra.mxu0 %v2373
        %v2527 = vpop.f32.mrf.mxu0
        %v2528 = vadd.f32 0.0, %v2527
        %2529 = vmatmul.f32.gmra.mxu0 %v2375
        %v2530 = vpop.f32.mrf.mxu0
        %v2531 = vadd.f32 0.0, %v2530
        %2532 = vmatmul.f32.gmra.mxu0 %v2377
        %v2533 = vpop.f32.mrf.mxu0
        %v2534 = vadd.f32 0.0, %v2533
        %2535 = vmatmul.f32.gmra.mxu0 %v2379
        %v2536 = vpop.f32.mrf.mxu0
        %v2537 = vadd.f32 0.0, %v2536
        %2538 = vmatmul.f32.gmra.mxu0 %v2381
        %v2539 = vpop.f32.mrf.mxu0
        %v2540 = vadd.f32 0.0, %v2539
        %2541 = vmatmul.f32.gmra.mxu0 %v2383
        %v2542 = vpop.f32.mrf.mxu0
        %v2543 = vadd.f32 0.0, %v2542
        %2544 = vmatmul.f32.gmra.mxu0 %v2385
        %v2545 = vpop.f32.mrf.mxu0
        %v2546 = vadd.f32 0.0, %v2545
        %2547 = vmatmul.f32.gmra.mxu0 %v2387
        %v2548 = vpop.f32.mrf.mxu0
        %v2549 = vadd.f32 0.0, %v2548
        %2550 = vmatmul.f32.gmra.mxu0 %v2389
        %v2551 = vpop.f32.mrf.mxu0
        %v2552 = vadd.f32 0.0, %v2551
        %2553 = vmatmul.f32.gmra.mxu0 %v2391
        %v2554 = vpop.f32.mrf.mxu0
        %v2555 = vadd.f32 0.0, %v2554
        %2556 = vmatmul.f32.gmra.mxu0 %v2393
        %v2557 = vpop.f32.mrf.mxu0
        %v2558 = vadd.f32 0.0, %v2557
        %2559 = vmatmul.f32.gmra.mxu0 %v2395
        %v2560 = vpop.f32.mrf.mxu0
        %v2561 = vadd.f32 0.0, %v2560
        %2562 = vmatmul.f32.gmra.mxu0 %v2397
        %v2563 = vpop.f32.mrf.mxu0
        %v2564 = vadd.f32 0.0, %v2563
        %2565 = vmatmul.f32.gmra.mxu0 %v2399
        %v2566 = vpop.f32.mrf.mxu0
        %v2567 = vadd.f32 0.0, %v2566
        %2568 = vmatmul.f32.gmra.mxu0 %v2401
        %v2569 = vpop.f32.mrf.mxu0
        %v2570 = vadd.f32 0.0, %v2569
        %2571 = vmatmul.f32.gmra.mxu0 %v2403
        %v2572 = vpop.f32.mrf.mxu0
        %v2573 = vadd.f32 0.0, %v2572
        %2574 = vmatmul.f32.gmra.mxu0 %v2405
        %v2575 = vpop.f32.mrf.mxu0
        %v2576 = vadd.f32 0.0, %v2575
        %2577 = vmatmul.f32.gmra.mxu0 %v2407
        %v2578 = vpop.f32.mrf.mxu0
        %v2579 = vadd.f32 0.0, %v2578
        %2580 = vmatmul.f32.gmra.mxu0 %v2409
        %v2581 = vpop.f32.mrf.mxu0
        %v2582 = vadd.f32 0.0, %v2581
        %2583 = vmatmul.f32.gmra.mxu0 %v2411
        %v2584 = vpop.f32.mrf.mxu0
        %v2585 = vadd.f32 0.0, %v2584
        %2586 = vmatmul.f32.gmra.mxu0 %v2413
        %v2587 = vpop.f32.mrf.mxu0
        %v2588 = vadd.f32 0.0, %v2587
        %2589 = vmatmul.f32.gmra.mxu0 %v2415
        %v2590 = vpop.f32.mrf.mxu0
        %v2591 = vadd.f32 0.0, %v2590
        %2592 = vdwg.mxu0
        %v2593 = vrcp.pop %v2417
        %v2594 = vrcp.pop %v2419
        %v2595 = vrcp.pop %v2421
        %v2596 = vrcp.pop %v2423
        %v2597 = vrcp.pop %v2425
        %v2598 = vrcp.pop %v2427
        %v2599 = vrcp.pop %v2429
        %v2600 = vrcp.pop %v2431
        %v2601 = vrcp.pop %v2433
        %v2602 = vrcp.pop %v2435
        %v2603 = vrcp.pop %v2437
        %v2604 = vrcp.pop %v2439
        %v2605 = vrcp.pop %v2441
        %v2606 = vrcp.pop %v2443
        %v2607 = vrcp.pop %v2445
        %v2608 = vrcp.pop %v2447
        %v2609 = vrcp.pop %v2449
        %v2610 = vrcp.pop %v2451
        %v2611 = vrcp.pop %v2453
        %v2612 = vrcp.pop %v2455
        %v2613 = vrcp.pop %v2457
        %v2614 = vrcp.pop %v2459
        %v2615 = vrcp.pop %v2461
        %v2616 = vrcp.pop %v2463
        %v2617 = vrcp.pop %v2465
        %v2618 = vrcp.pop %v2467
        %v2619 = vrcp.pop %v2469
        %v2620 = vrcp.pop %v2471
        %v2621 = vrcp.pop %v2473
        %v2622 = vrcp.pop %v2475
        %v2623 = vrcp.pop %v2477
        %v2624 = vrcp.pop %v2479
        %v2625 = vmul.f32 %v2498, %v2593
        %v2626 = vmul.f32 %v2501, %v2594
        %v2627 = vmul.f32 %v2504, %v2595
        %v2628 = vmul.f32 %v2507, %v2596
        %v2629 = vmul.f32 %v2510, %v2597
        %v2630 = vmul.f32 %v2513, %v2598
        %v2631 = vmul.f32 %v2516, %v2599
        %v2632 = vmul.f32 %v2519, %v2600
        %v2633 = vmul.f32 %v2522, %v2601
        %v2634 = vmul.f32 %v2525, %v2602
        %v2635 = vmul.f32 %v2528, %v2603
        %v2636 = vmul.f32 %v2531, %v2604
        %v2637 = vmul.f32 %v2534, %v2605
        %v2638 = vmul.f32 %v2537, %v2606
        %v2639 = vmul.f32 %v2540, %v2607
        %v2640 = vmul.f32 %v2543, %v2608
        %v2641 = vmul.f32 %v2546, %v2609
        %v2642 = vmul.f32 %v2549, %v2610
        %v2643 = vmul.f32 %v2552, %v2611
        %v2644 = vmul.f32 %v2555, %v2612
        %v2645 = vmul.f32 %v2558, %v2613
        %v2646 = vmul.f32 %v2561, %v2614
        %v2647 = vmul.f32 %v2564, %v2615
        %v2648 = vmul.f32 %v2567, %v2616
        %v2649 = vmul.f32 %v2570, %v2617
        %v2650 = vmul.f32 %v2573, %v2618
        %v2651 = vmul.f32 %v2576, %v2619
        %v2652 = vmul.f32 %v2579, %v2620
        %v2653 = vmul.f32 %v2582, %v2621
        %v2654 = vmul.f32 %v2585, %v2622
        %v2655 = vmul.f32 %v2588, %v2623
        %v2656 = vmul.f32 %v2591, %v2624
        %v2657 = vld [vmem:[#allocation7 + $0x8] sm:$0xff]
        %v2658 = vld [vmem:[#allocation7 + $0x18] sm:$0xff]
        %v2659 = vld [vmem:[#allocation7 + $0x28] sm:$0xff]
        %v2660 = vld [vmem:[#allocation7 + $0x38] sm:$0xff]
        %v2661 = vld [vmem:[#allocation7 + $0x48] sm:$0xff]
        %v2662 = vld [vmem:[#allocation7 + $0x58] sm:$0xff]
        %v2663 = vld [vmem:[#allocation7 + $0x68] sm:$0xff]
        %v2664 = vld [vmem:[#allocation7 + $0x78] sm:$0xff]
        %2665 = vmatpush.xpose.msra.mxu0 %v2640
        %2666 = vmatpush.xpose.msra.mxu0 %v2639
        %2667 = vmatpush.xpose.msra.mxu0 %v2638
        %2668 = vmatpush.xpose.msra.mxu0 %v2637
        %2669 = vmatpush.xpose.msra.mxu0 %v2636
        %2670 = vmatpush.xpose.msra.mxu0 %v2635
        %2671 = vmatpush.xpose.msra.mxu0 %v2634
        %2672 = vmatpush.xpose.msra.mxu0 %v2633
        %2673 = vmatpush.xpose.msra.mxu0 %v2632
        %2674 = vmatpush.xpose.msra.mxu0 %v2631
        %2675 = vmatpush.xpose.msra.mxu0 %v2630
        %2676 = vmatpush.xpose.msra.mxu0 %v2629
        %2677 = vmatpush.xpose.msra.mxu0 %v2628
        %2678 = vmatpush.xpose.msra.mxu0 %v2627
        %2679 = vmatpush.xpose.msra.mxu0 %v2626
        %2680 = vmatpush.xpose.msra.mxu0 %v2625
        %2681 = vmatmul.f32.gmra.mxu0 %v2657
        %v2682 = vpop.f32.mrf.mxu0
        %v2683 = vadd.f32 0.0, %v2682
        %2684 = vmatmul.f32.gmra.mxu0 %v2658
        %v2685 = vpop.f32.mrf.mxu0
        %v2686 = vadd.f32 0.0, %v2685
        %2687 = vmatmul.f32.gmra.mxu0 %v2659
        %v2688 = vpop.f32.mrf.mxu0
        %v2689 = vadd.f32 0.0, %v2688
        %2690 = vmatmul.f32.gmra.mxu0 %v2660
        %v2691 = vpop.f32.mrf.mxu0
        %v2692 = vadd.f32 0.0, %v2691
        %2693 = vmatmul.f32.gmra.mxu0 %v2661
        %v2694 = vpop.f32.mrf.mxu0
        %v2695 = vadd.f32 0.0, %v2694
        %2696 = vmatmul.f32.gmra.mxu0 %v2662
        %v2697 = vpop.f32.mrf.mxu0
        %v2698 = vadd.f32 0.0, %v2697
        %2699 = vmatmul.f32.gmra.mxu0 %v2663
        %v2700 = vpop.f32.mrf.mxu0
        %v2701 = vadd.f32 0.0, %v2700
        %2702 = vmatmul.f32.gmra.mxu0 %v2664
        %v2703 = vpop.f32.mrf.mxu0
        %v2704 = vadd.f32 0.0, %v2703
        %2705 = vdwg.mxu0
        %2706 = vmatpush.xpose.msra.mxu0 %v2656
        %2707 = vmatpush.xpose.msra.mxu0 %v2655
        %2708 = vmatpush.xpose.msra.mxu0 %v2654
        %2709 = vmatpush.xpose.msra.mxu0 %v2653
        %2710 = vmatpush.xpose.msra.mxu0 %v2652
        %2711 = vmatpush.xpose.msra.mxu0 %v2651
        %2712 = vmatpush.xpose.msra.mxu0 %v2650
        %2713 = vmatpush.xpose.msra.mxu0 %v2649
        %2714 = vmatpush.xpose.msra.mxu0 %v2648
        %2715 = vmatpush.xpose.msra.mxu0 %v2647
        %2716 = vmatpush.xpose.msra.mxu0 %v2646
        %2717 = vmatpush.xpose.msra.mxu0 %v2645
        %2718 = vmatpush.xpose.msra.mxu0 %v2644
        %2719 = vmatpush.xpose.msra.mxu0 %v2643
        %2720 = vmatpush.xpose.msra.mxu0 %v2642
        %2721 = vmatpush.xpose.msra.mxu0 %v2641
        %2722 = vmatmul.f32.gmra.mxu0 %v2657
        %v2723 = vpop.f32.mrf.mxu0
        %v2724 = vadd.f32 0.0, %v2723
        %2725 = vmatmul.f32.gmra.mxu0 %v2658
        %v2726 = vpop.f32.mrf.mxu0
        %v2727 = vadd.f32 0.0, %v2726
        %2728 = vmatmul.f32.gmra.mxu0 %v2659
        %v2729 = vpop.f32.mrf.mxu0
        %v2730 = vadd.f32 0.0, %v2729
        %2731 = vmatmul.f32.gmra.mxu0 %v2660
        %v2732 = vpop.f32.mrf.mxu0
        %v2733 = vadd.f32 0.0, %v2732
        %2734 = vmatmul.f32.gmra.mxu0 %v2661
        %v2735 = vpop.f32.mrf.mxu0
        %v2736 = vadd.f32 0.0, %v2735
        %2737 = vmatmul.f32.gmra.mxu0 %v2662
        %v2738 = vpop.f32.mrf.mxu0
        %v2739 = vadd.f32 0.0, %v2738
        %2740 = vmatmul.f32.gmra.mxu0 %v2663
        %v2741 = vpop.f32.mrf.mxu0
        %v2742 = vadd.f32 0.0, %v2741
        %2743 = vmatmul.f32.gmra.mxu0 %v2664
        %v2744 = vpop.f32.mrf.mxu0
        %v2745 = vadd.f32 0.0, %v2744
        %2746 = vdwg.mxu0
        %2747 = vmatpush.xpose.msra.mxu0 %v2118
        %2748 = vmatpush.xpose.msra.mxu0 %v2117
        %2749 = vmatpush.xpose.msra.mxu0 %v2116
        %2750 = vmatpush.xpose.msra.mxu0 %v2115
        %2751 = vmatpush.xpose.msra.mxu0 %v2114
        %2752 = vmatpush.xpose.msra.mxu0 %v2113
        %2753 = vmatpush.xpose.msra.mxu0 %v2112
        %2754 = vmatpush.xpose.msra.mxu0 %v2111
        %2755 = vmatpush.xpose.msra.mxu0 %v2110
        %2756 = vmatpush.xpose.msra.mxu0 %v2109
        %2757 = vmatpush.xpose.msra.mxu0 %v2108
        %2758 = vmatpush.xpose.msra.mxu0 %v2107
        %2759 = vmatpush.xpose.msra.mxu0 %v2106
        %2760 = vmatpush.xpose.msra.mxu0 %v2105
        %2761 = vmatpush.xpose.msra.mxu0 %v2104
        %2762 = vmatpush.xpose.msra.mxu0 %v2103
        %2763 = vmatmul.f32.gmra.mxu0 %v2135
        %v2764 = vpop.f32.mrf.mxu0
        %v2765 = vadd.f32 %v2683, %v2764
        %2766 = vmatmul.f32.gmra.mxu0 %v2136
        %v2767 = vpop.f32.mrf.mxu0
        %v2768 = vadd.f32 %v2686, %v2767
        %2769 = vmatmul.f32.gmra.mxu0 %v2137
        %v2770 = vpop.f32.mrf.mxu0
        %v2771 = vadd.f32 %v2689, %v2770
        %2772 = vmatmul.f32.gmra.mxu0 %v2138
        %v2773 = vpop.f32.mrf.mxu0
        %v2774 = vadd.f32 %v2692, %v2773
        %2775 = vmatmul.f32.gmra.mxu0 %v2139
        %v2776 = vpop.f32.mrf.mxu0
        %v2777 = vadd.f32 %v2695, %v2776
        %2778 = vmatmul.f32.gmra.mxu0 %v2140
        %v2779 = vpop.f32.mrf.mxu0
        %v2780 = vadd.f32 %v2698, %v2779
        %2781 = vmatmul.f32.gmra.mxu0 %v2141
        %v2782 = vpop.f32.mrf.mxu0
        %v2783 = vadd.f32 %v2701, %v2782
        %2784 = vmatmul.f32.gmra.mxu0 %v2142
        %v2785 = vpop.f32.mrf.mxu0
        %v2786 = vadd.f32 %v2704, %v2785
        %2787 = vdwg.mxu0
        %2788 = vmatpush.xpose.msra.mxu0 %v2134
        %2789 = vmatpush.xpose.msra.mxu0 %v2133
        %2790 = vmatpush.xpose.msra.mxu0 %v2132
        %2791 = vmatpush.xpose.msra.mxu0 %v2131
        %2792 = vmatpush.xpose.msra.mxu0 %v2130
        %2793 = vmatpush.xpose.msra.mxu0 %v2129
        %2794 = vmatpush.xpose.msra.mxu0 %v2128
        %2795 = vmatpush.xpose.msra.mxu0 %v2127
        %2796 = vmatpush.xpose.msra.mxu0 %v2126
        %2797 = vmatpush.xpose.msra.mxu0 %v2125
        %2798 = vmatpush.xpose.msra.mxu0 %v2124
        %2799 = vmatpush.xpose.msra.mxu0 %v2123
        %2800 = vmatpush.xpose.msra.mxu0 %v2122
        %2801 = vmatpush.xpose.msra.mxu0 %v2121
        %2802 = vmatpush.xpose.msra.mxu0 %v2120
        %2803 = vmatpush.xpose.msra.mxu0 %v2119
        %2804 = vmatmul.f32.gmra.mxu0 %v2135
        %v2805 = vpop.f32.mrf.mxu0
        %v2806 = vadd.f32 %v2724, %v2805
        %2807 = vmatmul.f32.gmra.mxu0 %v2136
        %v2808 = vpop.f32.mrf.mxu0
        %v2809 = vadd.f32 %v2727, %v2808
        %2810 = vmatmul.f32.gmra.mxu0 %v2137
        %v2811 = vpop.f32.mrf.mxu0
        %v2812 = vadd.f32 %v2730, %v2811
        %2813 = vmatmul.f32.gmra.mxu0 %v2138
        %v2814 = vpop.f32.mrf.mxu0
        %v2815 = vadd.f32 %v2733, %v2814
        %2816 = vmatmul.f32.gmra.mxu0 %v2139
        %v2817 = vpop.f32.mrf.mxu0
        %v2818 = vadd.f32 %v2736, %v2817
        %2819 = vmatmul.f32.gmra.mxu0 %v2140
        %v2820 = vpop.f32.mrf.mxu0
        %v2821 = vadd.f32 %v2739, %v2820
        %2822 = vmatmul.f32.gmra.mxu0 %v2141
        %v2823 = vpop.f32.mrf.mxu0
        %v2824 = vadd.f32 %v2742, %v2823
        %2825 = vmatmul.f32.gmra.mxu0 %v2142
        %v2826 = vpop.f32.mrf.mxu0
        %v2827 = vadd.f32 %v2745, %v2826
        %2828 = vdwg.mxu0
        %2829 = vst [vmem:[%s334] sm:$0xff] %v2765
        %2830 = vst [vmem:[%s334 + $0x8] sm:$0xff] %v2806
        %2831 = vst [vmem:[%s334 + $0x10] sm:$0xff] %v2768
        %2832 = vst [vmem:[%s334 + $0x18] sm:$0xff] %v2809
        %2833 = vst [vmem:[%s334 + $0x20] sm:$0xff] %v2771
        %2834 = vst [vmem:[%s334 + $0x28] sm:$0xff] %v2812
        %2835 = vst [vmem:[%s334 + $0x30] sm:$0xff] %v2774
        %2836 = vst [vmem:[%s334 + $0x38] sm:$0xff] %v2815
        %2837 = vst [vmem:[%s334 + $0x40] sm:$0xff] %v2777
        %2838 = vst [vmem:[%s334 + $0x48] sm:$0xff] %v2818
        %2839 = vst [vmem:[%s334 + $0x50] sm:$0xff] %v2780
        %2840 = vst [vmem:[%s334 + $0x58] sm:$0xff] %v2821
        %2841 = vst [vmem:[%s334 + $0x60] sm:$0xff] %v2783
        %2842 = vst [vmem:[%s334 + $0x68] sm:$0xff] %v2824
        %2843 = vst [vmem:[%s334 + $0x70] sm:$0xff] %v2786
        %2844 = vst [vmem:[%s334 + $0x78] sm:$0xff] %v2827
        %s2845 = sand.u32 %s188, 1
        %s2846 = scalar_lea.sflag [#allocation4], %s2845
        %s2847 = sand.u32 %s188, 1
        %s2848 = smul.addr %s2847, 128
        %s2849 = scalar_lea.vmem [#allocation8], %s2848
        // Predicated region
        $region61: #{tpu_custom_call.1} parent=47 // pred_check
          %p2850 = pneg %p198
        $region62: #{tpu_custom_call.1} parent=47 // pred_check_branch
          %2852 = sbr.rel (%p2850) target = $region64
        $region63: #{tpu_custom_call.1} parent=47 // pred_region
          %2854 = vsyncadd %s2846, 0
          %s2855 = smul.addr %s23, 16
          %s2856 = smul.addr %s2855, 8
          %s2857 = scalar_lea.hbm %s7, %s2856
          %s2858 = sshll.u32 %s2849, 4
          %s2859 = int_to_ptr.vmem [resolvable:$true] %s2858
          %s2860 = sshll.u32 %s2857, 4
          %s2861 = int_to_ptr.hbm [resolvable:$true] %s2860
          %2866 = dma.vmem_to_hbm [thread:$0]  %s2859, 2048, %s2861, %s2846, 256, 256, 16
        $region64: #{tpu_custom_call.1} parent=47 // pred_fallthru
          _
      $region48: #{tpu_custom_call.1} parent=5 // pred_fallthru
        _
      %p2867 = scmp.le.s32.totalorder 2, %s18
      // Predicated region
      $region65: #{tpu_custom_call.1} parent=5 // pred_check
        %p2868 = pneg %p2867
      $region66: #{tpu_custom_call.1} parent=5 // pred_check_branch
        %2870 = sbr.rel (%p2868) target = $region68
      $region67: #{tpu_custom_call.1} parent=5 // pred_region
        %s2871 = ssub.s32 %s18, 2
        // Predicated region
        $region69: #{tpu_custom_call.1} parent=67 // pred_check
          %p2872 = pneg %p204
        $region70: #{tpu_custom_call.1} parent=67 // pred_check_branch
          %2874 = sbr.rel (%p2872) target = $region72
        $region71: #{tpu_custom_call.1} parent=67 // pred_region
          %s2875 = sand.u32 %s189, 1
          %s2876 = scalar_lea.sflag [#allocation4], %s2875
          %s2877 = sand.u32 %s189, 1
          %s2878 = smul.addr %s2877, 128
          %s2879 = scalar_lea.vmem [#allocation8], %s2878
          %2881 = dma.done %s2876, 2048
        $region72: #{tpu_custom_call.1} parent=67 // pred_fallthru
          _
      $region68: #{tpu_custom_call.1} parent=5 // pred_fallthru
        _
    $region6: #{tpu_custom_call.1} parent=1 // loop_footer
      %s22 = sadd.s32 1, %s18
    $region7: #{tpu_custom_call.1} parent=1 // loop_footer_branch
      %17 = sbr.rel target = $region3
    $region8: #{tpu_custom_call.1} parent=1 // loop_exit
      _
    %2882 = vsyncpa [#allocation3], 1
    %s2883 = scalar_lea.sflag [#allocation3], 1
    %2884 = vsyncpa %s2883, 1
    %2885 = vsyncpa [#allocation6], 1
    %2886 = vsyncpa [#allocation4], 1
    %s2887 = scalar_lea.sflag [#allocation4], 1
    %2888 = vsyncpa %s2887, 1

</llo_original>
